<compile_context>
chip_gen: v7x
topology: tpu7x:2x2x1
jax: 0.10.0
libtpu: 0.0.40
codegen_flags: <defaults>
</compile_context>

<pallas_src>
import functools

import jax
import jax.numpy as jnp
from jax.experimental import pallas as pl
from jax.experimental.pallas import tpu as pltpu

LN_EPS = 1e-6          # matches nn.LayerNorm(eps=1e-06)
L2_EPS = 1e-12         # matches F.normalize default eps
LEAKY_SLOPE = 0.01     # PyTorch nn.LeakyReLU default


def _leaky_relu(x):
    return jnp.where(x >= 0, x, LEAKY_SLOPE * x)


def _layernorm(x, gamma, beta):
    # two-pass statistics (matches nn.LayerNorm; robust to cancellation)
    mu = jnp.mean(x, axis=-1, keepdims=True)
    xc = x - mu
    var = jnp.mean(xc * xc, axis=-1, keepdims=True)
    return xc * jax.lax.rsqrt(var + LN_EPS) * gamma + beta


def _dot_bf16(a_f32, w_bf16):
    # single-pass bf16 MXU matmul, f32 accumulation
    return jnp.dot(a_f32.astype(jnp.bfloat16), w_bf16,
                   preferred_element_type=jnp.float32)


def esmbind_kernel(fa_ref, fb_ref, gb1_ref, gb2_ref, wblk_ref, c12_ref,
                   w3_ref, ch_ref, bc_ref, out_ref, *, d1, h1):
    # gb1: (2, D1) rows = [gamma1, beta1];  gb2: (2, D2) rows = [gamma2, beta2]
    # wblk: (D1+D2, H1+H2) bf16 block-diag(W1, W2)
    # c12: (3, H1+H2) rows = [b1|b2], gamma3, beta3
    # w3:  (H1+H2, H) bf16
    # ch:  (4, H) rows = b3, gamma_c, beta_c, wc_row;  bc: (1, 1)

    # ---- modality LayerNorms ----
    xa = _layernorm(fa_ref[...], gb1_ref[0:1, :], gb1_ref[1:2, :])
    xb = _layernorm(fb_ref[...], gb2_ref[0:1, :], gb2_ref[1:2, :])

    # ---- fused modality projection: block-diag matmul as two accumulating
    #      K-chunks (no in-kernel concatenate of xa|xb needed) ----
    h = (_dot_bf16(xa, wblk_ref[0:d1, :]) + _dot_bf16(xb, wblk_ref[d1:, :])
         + c12_ref[0:1, :])
    h = _leaky_relu(h)

    # ---- per-modality L2 normalize on the fused (tm, H1+H2) activation ----
    lane = jax.lax.broadcasted_iota(jnp.int32, h.shape, 1)
    is_a = lane < h1
    hsq = h * h
    q_tot = jnp.sum(hsq, axis=-1, keepdims=True)
    q_a = jnp.sum(jnp.where(is_a, hsq, 0.0), axis=-1, keepdims=True)
    q_b = q_tot - q_a
    r_a = jax.lax.rsqrt(jnp.maximum(q_a, L2_EPS * L2_EPS))
    r_b = jax.lax.rsqrt(jnp.maximum(q_b, L2_EPS * L2_EPS))
    o = h * jnp.where(is_a, r_a, r_b)

    # ---- fusion block: LayerNorm over the (virtual) concat + one matmul ----
    z = _layernorm(o, c12_ref[1:2, :], c12_ref[2:3, :])
    comb = _leaky_relu(_dot_bf16(z, w3_ref[...]) + ch_ref[0:1, :])

    # ---- classifier head: LN + VPU/XLU row reduction (no degenerate (H,1) matmul) ----
    xh = _layernorm(comb, ch_ref[1:2, :], ch_ref[2:3, :])
    logit = jnp.sum(xh * ch_ref[3:4, :], axis=-1, keepdims=True) + bc_ref[...]

    # dense store: (tm, 1) column -> 4 B per row of HBM write traffic
    out_ref[...] = logit


def esmbind_multimodal_forward(feat_a, feat_b, params, *, tm=128):
    """feat_a: [N, D1], feat_b: [N, D2] -> logits [N] (float32), one ligand head."""
    N, D1 = feat_a.shape
    Nb, D2 = feat_b.shape
    assert N == Nb
    H1 = params["w1"].shape[1]
    H2 = params["w2"].shape[1]
    H = params["w3"].shape[1]
    Hc = H1 + H2

    # ragged N handled by Pallas edge blocks (no jnp.pad copies of the features)
    n_blocks = pl.cdiv(N, tm)

    # block-diagonal modality weight, bf16
    wblk = jnp.zeros((D1 + D2, Hc), jnp.float32)
    wblk = wblk.at[:D1, :H1].set(params["w1"]).at[D1:, H1:].set(params["w2"])
    wblk = wblk.astype(jnp.bfloat16)
    w3 = params["w3"].astype(jnp.bfloat16)

    # pack the small per-width constants (fewer DMA descriptors / VMEM tiles)
    gb1 = jnp.concatenate([params["g1"], params["be1"]], axis=0)        # (2, D1)
    gb2 = jnp.concatenate([params["g2"], params["be2"]], axis=0)        # (2, D2)
    b12 = jnp.concatenate([params["b1"], params["b2"]], axis=1)         # (1, Hc)
    c12 = jnp.concatenate([b12, params["g3"], params["be3"]], axis=0)   # (3, Hc)
    ch = jnp.concatenate([params["b3"], params["gc"], params["bec"],
                          params["wc"]], axis=0)                        # (4, H)

    const = lambda r, c: pl.BlockSpec((r, c), lambda i: (0, 0))
    in_specs = [
        pl.BlockSpec((tm, D1), lambda i: (i, 0)),
        pl.BlockSpec((tm, D2), lambda i: (i, 0)),
        const(2, D1), const(2, D2),
        const(D1 + D2, Hc), const(3, Hc),
        const(Hc, H), const(4, H), const(1, 1),
    ]

    # explicit VMEM budget: double-buffered feature/logit tiles + 2x constants
    # (padded to (8,128) tiles), plus generous headroom for spill/relayout scratch.
    lanes = lambda c: ((c + 127) // 128) * 128
    subl = lambda r: ((r + 7) // 8) * 8
    vmem_limit = int(
        2 * tm * (lanes(D1) + lanes(D2) + lanes(1)) * 4
        + 2 * (subl(D1 + D2) * lanes(Hc) + subl(Hc) * lanes(H)) * 2
        + 2 * (subl(2) * (lanes(D1) + lanes(D2)) + subl(3) * lanes(Hc)
               + subl(4) * lanes(H) + 8 * 128) * 4
        + (8 << 20))

    out = pl.pallas_call(
        functools.partial(esmbind_kernel, d1=D1, h1=H1),
        out_shape=jax.ShapeDtypeStruct((n_blocks * tm, 1), jnp.float32),
        grid_spec=pltpu.PrefetchScalarGridSpec(
            num_scalar_prefetch=0,
            grid=(n_blocks,),
            in_specs=in_specs,
            out_specs=pl.BlockSpec((tm, 1), lambda i: (i, 0)),
        ),
        compiler_params=pltpu.CompilerParams(
            dimension_semantics=("parallel",),
            vmem_limit_bytes=vmem_limit,
        ),
    )(feat_a, feat_b, gb1, gb2, wblk, c12, w3, ch, params["bc"])
    return out.reshape(-1)[:N]


# ------------------------- parameter init (deterministic) -------------------------
def xavier_uniform(key, fan_in, fan_out, shape):
    limit = (6.0 / (fan_in + fan_out)) ** 0.5
    return jax.random.uniform(key, shape, jnp.float32, -limit, limit)


def make_params(key, d1, d2, h1, h2, h):
    ks = jax.random.split(key, 8)
    return {
        # block 0  (Linear weights stored as [in, out])
        "g1": jnp.ones((1, d1), jnp.float32), "be1": jnp.zeros((1, d1), jnp.float32),
        "w1": xavier_uniform(ks[0], d1, h1, (d1, h1)),
        "b1": 0.01 * jax.random.normal(ks[1], (1, h1), jnp.float32),
        # block 1
        "g2": jnp.ones((1, d2), jnp.float32), "be2": jnp.zeros((1, d2), jnp.float32),
        "w2": xavier_uniform(ks[2], d2, h2, (d2, h2)),
        "b2": 0.01 * jax.random.normal(ks[3], (1, h2), jnp.float32),
        # block 2 (fusion)
        "g3": jnp.ones((1, h1 + h2), jnp.float32), "be3": jnp.zeros((1, h1 + h2), jnp.float32),
        "w3": xavier_uniform(ks[4], h1 + h2, h, (h1 + h2, h)),
        "b3": 0.01 * jax.random.normal(ks[5], (1, h), jnp.float32),
        # classifier head (one ligand, e.g. 'ZN'); weight kept as a row [1, H]
        "gc": jnp.ones((1, h), jnp.float32), "bec": jnp.zeros((1, h), jnp.float32),
        "wc": xavier_uniform(ks[6], h, 1, (1, h)),
        "bc": 0.01 * jax.random.normal(ks[7], (1, 1), jnp.float32),
    }


# ------------------------- pure-JAX reference (PyTorch-faithful math) -------------------------
def reference_forward(feat_a, feat_b, p, *, matmul_dtype=jnp.float32):
    def ln(x, g, b):
        mu = jnp.mean(x, axis=-1, keepdims=True)
        xc = x - mu
        var = jnp.mean(xc * xc, axis=-1, keepdims=True)
        return xc / jnp.sqrt(var + LN_EPS) * g + b

    def l2(x):
        nrm = jnp.sqrt(jnp.sum(x * x, axis=-1, keepdims=True))
        return x / jnp.maximum(nrm, L2_EPS)

    def lrelu(x):
        return jnp.where(x >= 0, x, LEAKY_SLOPE * x)

    def mm(a, w):
        return jnp.dot(a.astype(matmul_dtype), w.astype(matmul_dtype),
                       preferred_element_type=jnp.float32)

    o1 = l2(lrelu(mm(ln(feat_a, p["g1"], p["be1"]), p["w1"]) + p["b1"]))
    o2 = l2(lrelu(mm(ln(feat_b, p["g2"], p["be2"]), p["w2"]) + p["b2"]))
    cat = jnp.concatenate([o1, o2], axis=-1)
    comb = lrelu(mm(ln(cat, p["g3"], p["be3"]), p["w3"]) + p["b3"])
    xh = ln(comb, p["gc"], p["bec"])
    return jnp.sum(xh * p["wc"], axis=-1) + p["bc"][0, 0]


if __name__ == "__main__":
    # small shapes: 256 residues, feature_dim_1=64, feature_dim_2=32,
    # hidden_dim_1=32, hidden_dim_2=32, hidden_dim=64; tm=128 -> 2 grid steps.
    N, D1, D2, H1, H2, H = 256, 64, 32, 32, 32, 64

    key = jax.random.PRNGKey(0)
    ka, kb, kp = jax.random.split(key, 3)
    feat_a = jax.random.normal(ka, (N, D1), jnp.float32)
    feat_b = jax.random.normal(kb, (N, D2), jnp.float32)
    params = make_params(kp, D1, D2, H1, H2, H)

    logits = esmbind_multimodal_forward(feat_a, feat_b, params, tm=128)
    logits = jax.block_until_ready(logits)
    assert logits.shape == (N,)

    # tight check vs a reference using the same bf16 matmul inputs
    ref_bf16 = reference_forward(feat_a, feat_b, params, matmul_dtype=jnp.bfloat16)
    assert jnp.allclose(logits, ref_bf16, atol=2e-3, rtol=2e-3), "mismatch vs bf16-matched reference"

    # loose sanity check vs full-f32 PyTorch-faithful math (bf16 drift expected)
    ref_f32 = reference_forward(feat_a, feat_b, params, matmul_dtype=jnp.float32)
    assert jnp.allclose(logits, ref_f32, atol=1e-1, rtol=1e-1), "drift vs f32 reference too large"

    print("KERNEL_OK")
</pallas_src>

<mosaic_0001>
module attributes {stable_mosaic.version = 11 : i64} {
  func.func @esmbind_kernel(%arg0: i32, %arg1: memref<128x64xf32, #tpu.memory_space<vmem>>, %arg2: memref<128x32xf32, #tpu.memory_space<vmem>>, %arg3: memref<2x64xf32, #tpu.memory_space<vmem>>, %arg4: memref<2x32xf32, #tpu.memory_space<vmem>>, %arg5: memref<96x64xbf16, #tpu.memory_space<vmem>>, %arg6: memref<3x64xf32, #tpu.memory_space<vmem>>, %arg7: memref<64x64xbf16, #tpu.memory_space<vmem>>, %arg8: memref<4x64xf32, #tpu.memory_space<vmem>>, %arg9: memref<1x1xf32, #tpu.memory_space<vmem>>, %arg10: memref<128x1xf32, #tpu.memory_space<vmem>>) attributes {dimension_semantics = [#tpu.dimension_semantics<parallel>], iteration_bounds = array<i64: 2>, scalar_prefetch = 0 : i64, scratch_operands = 0 : i64, tpu.core_type = #tpu.core_type<tc>, window_params = [{transform_indices = @transform_0, window_bounds = array<i64: 128, 64>}, {transform_indices = @transform_1, window_bounds = array<i64: 128, 32>}, {pipeline_mode = #tpu.pipeline_mode<synchronous>, transform_indices = @transform_2, window_bounds = array<i64: 2, 64>}, {pipeline_mode = #tpu.pipeline_mode<synchronous>, transform_indices = @transform_3, window_bounds = array<i64: 2, 32>}, {pipeline_mode = #tpu.pipeline_mode<synchronous>, transform_indices = @transform_4, window_bounds = array<i64: 96, 64>}, {pipeline_mode = #tpu.pipeline_mode<synchronous>, transform_indices = @transform_5, window_bounds = array<i64: 3, 64>}, {pipeline_mode = #tpu.pipeline_mode<synchronous>, transform_indices = @transform_6, window_bounds = array<i64: 64, 64>}, {pipeline_mode = #tpu.pipeline_mode<synchronous>, transform_indices = @transform_7, window_bounds = array<i64: 4, 64>}, {pipeline_mode = #tpu.pipeline_mode<synchronous>, transform_indices = @transform_8, window_bounds = array<i64: 1, 1>}, {transform_indices = @transform_9, window_bounds = array<i64: 128, 1>}]} {
    %c0 = arith.constant 0 : index
    %c0_0 = arith.constant 0 : index
    %0 = vector.load %arg1[%c0, %c0_0] : memref<128x64xf32, #tpu.memory_space<vmem>>, vector<128x64xf32>
    %c0_1 = arith.constant 0 : index
    %c0_2 = arith.constant 0 : index
    %1 = vector.load %arg3[%c0_1, %c0_2] : memref<2x64xf32, #tpu.memory_space<vmem>>, vector<1x64xf32>
    %c1 = arith.constant 1 : index
    %c0_3 = arith.constant 0 : index
    %2 = vector.load %arg3[%c1, %c0_3] : memref<2x64xf32, #tpu.memory_space<vmem>>, vector<1x64xf32>
    %cst = arith.constant dense<0.000000e+00> : vector<128xf32>
    %3 = vector.multi_reduction <add>, %0, %cst [1] : vector<128x64xf32> to vector<128xf32>
    %4 = vector.shape_cast %3 : vector<128xf32> to vector<128x1xf32>
    %cst_4 = arith.constant 6.400000e+01 : f32
    %5 = vector.broadcast %cst_4 : f32 to vector<128x1xf32>
    %6 = arith.divf %4, %5 : vector<128x1xf32>
    %7 = vector.broadcast %6 : vector<128x1xf32> to vector<128x64xf32>
    %8 = arith.subf %0, %7 : vector<128x64xf32>
    %9 = arith.mulf %8, %8 : vector<128x64xf32>
    %cst_5 = arith.constant dense<0.000000e+00> : vector<128xf32>
    %10 = vector.multi_reduction <add>, %9, %cst_5 [1] : vector<128x64xf32> to vector<128xf32>
    %11 = vector.shape_cast %10 : vector<128xf32> to vector<128x1xf32>
    %cst_6 = arith.constant 6.400000e+01 : f32
    %12 = vector.broadcast %cst_6 : f32 to vector<128x1xf32>
    %13 = arith.divf %11, %12 : vector<128x1xf32>
    %cst_7 = arith.constant 9.99999997E-7 : f32
    %14 = vector.broadcast %cst_7 : f32 to vector<128x1xf32>
    %15 = arith.addf %13, %14 : vector<128x1xf32>
    %16 = math.rsqrt %15 : vector<128x1xf32>
    %17 = vector.broadcast %16 : vector<128x1xf32> to vector<128x64xf32>
    %18 = arith.mulf %8, %17 : vector<128x64xf32>
    %19 = vector.broadcast %1 : vector<1x64xf32> to vector<128x64xf32>
    %20 = arith.mulf %18, %19 : vector<128x64xf32>
    %21 = vector.broadcast %2 : vector<1x64xf32> to vector<128x64xf32>
    %22 = arith.addf %20, %21 : vector<128x64xf32>
    %c0_8 = arith.constant 0 : index
    %c0_9 = arith.constant 0 : index
    %23 = vector.load %arg2[%c0_8, %c0_9] : memref<128x32xf32, #tpu.memory_space<vmem>>, vector<128x32xf32>
    %c0_10 = arith.constant 0 : index
    %c0_11 = arith.constant 0 : index
    %24 = vector.load %arg4[%c0_10, %c0_11] : memref<2x32xf32, #tpu.memory_space<vmem>>, vector<1x32xf32>
    %c1_12 = arith.constant 1 : index
    %c0_13 = arith.constant 0 : index
    %25 = vector.load %arg4[%c1_12, %c0_13] : memref<2x32xf32, #tpu.memory_space<vmem>>, vector<1x32xf32>
    %cst_14 = arith.constant dense<0.000000e+00> : vector<128xf32>
    %26 = vector.multi_reduction <add>, %23, %cst_14 [1] : vector<128x32xf32> to vector<128xf32>
    %27 = vector.shape_cast %26 : vector<128xf32> to vector<128x1xf32>
    %cst_15 = arith.constant 3.200000e+01 : f32
    %28 = vector.broadcast %cst_15 : f32 to vector<128x1xf32>
    %29 = arith.divf %27, %28 : vector<128x1xf32>
    %30 = vector.broadcast %29 : vector<128x1xf32> to vector<128x32xf32>
    %31 = arith.subf %23, %30 : vector<128x32xf32>
    %32 = arith.mulf %31, %31 : vector<128x32xf32>
    %cst_16 = arith.constant dense<0.000000e+00> : vector<128xf32>
    %33 = vector.multi_reduction <add>, %32, %cst_16 [1] : vector<128x32xf32> to vector<128xf32>
    %34 = vector.shape_cast %33 : vector<128xf32> to vector<128x1xf32>
    %cst_17 = arith.constant 3.200000e+01 : f32
    %35 = vector.broadcast %cst_17 : f32 to vector<128x1xf32>
    %36 = arith.divf %34, %35 : vector<128x1xf32>
    %cst_18 = arith.constant 9.99999997E-7 : f32
    %37 = vector.broadcast %cst_18 : f32 to vector<128x1xf32>
    %38 = arith.addf %36, %37 : vector<128x1xf32>
    %39 = math.rsqrt %38 : vector<128x1xf32>
    %40 = vector.broadcast %39 : vector<128x1xf32> to vector<128x32xf32>
    %41 = arith.mulf %31, %40 : vector<128x32xf32>
    %42 = vector.broadcast %24 : vector<1x32xf32> to vector<128x32xf32>
    %43 = arith.mulf %41, %42 : vector<128x32xf32>
    %44 = vector.broadcast %25 : vector<1x32xf32> to vector<128x32xf32>
    %45 = arith.addf %43, %44 : vector<128x32xf32>
    %c0_19 = arith.constant 0 : index
    %c0_20 = arith.constant 0 : index
    %46 = vector.load %arg5[%c0_19, %c0_20] : memref<96x64xbf16, #tpu.memory_space<vmem>>, vector<64x64xbf16>
    %47 = arith.truncf %22 : vector<128x64xf32> to vector<128x64xbf16>
    %cst_21 = arith.constant dense<0.000000e+00> : vector<128x64xf32>
    %48 = tpu.matmul %47, %46, %cst_21 {dimension_numbers = #tpu.dot_dimension_numbers<[1], [0], [0], [1], [0, 0, 1, 1], [], []>} : vector<128x64xbf16>, vector<64x64xbf16>, vector<128x64xf32> -> vector<128x64xf32>
    %c64 = arith.constant 64 : index
    %c0_22 = arith.constant 0 : index
    %49 = vector.load %arg5[%c64, %c0_22] : memref<96x64xbf16, #tpu.memory_space<vmem>>, vector<32x64xbf16>
    %50 = arith.truncf %45 : vector<128x32xf32> to vector<128x32xbf16>
    %cst_23 = arith.constant dense<0.000000e+00> : vector<128x64xf32>
    %51 = tpu.matmul %50, %49, %cst_23 {dimension_numbers = #tpu.dot_dimension_numbers<[1], [0], [0], [1], [0, 0, 1, 1], [], []>} : vector<128x32xbf16>, vector<32x64xbf16>, vector<128x64xf32> -> vector<128x64xf32>
    %52 = arith.addf %48, %51 : vector<128x64xf32>
    %c0_24 = arith.constant 0 : index
    %c0_25 = arith.constant 0 : index
    %53 = vector.load %arg6[%c0_24, %c0_25] : memref<3x64xf32, #tpu.memory_space<vmem>>, vector<1x64xf32>
    %54 = vector.broadcast %53 : vector<1x64xf32> to vector<128x64xf32>
    %55 = arith.addf %52, %54 : vector<128x64xf32>
    %cst_26 = arith.constant 0.000000e+00 : f32
    %56 = vector.broadcast %cst_26 : f32 to vector<128x64xf32>
    %57 = arith.cmpf oge, %55, %56 : vector<128x64xf32>
    %cst_27 = arith.constant 0.00999999977 : f32
    %58 = vector.broadcast %cst_27 : f32 to vector<128x64xf32>
    %59 = arith.mulf %58, %55 : vector<128x64xf32>
    %60 = arith.select %57, %55, %59 : vector<128x64xi1>, vector<128x64xf32>
    %61 = tpu.iota {dimensions = array<i32: 1>} : vector<128x64xi32>
    %c32_i32 = arith.constant 32 : i32
    %62 = vector.broadcast %c32_i32 : i32 to vector<128x64xi32>
    %63 = arith.cmpi slt, %61, %62 : vector<128x64xi32>
    %64 = arith.mulf %60, %60 : vector<128x64xf32>
    %cst_28 = arith.constant dense<0.000000e+00> : vector<128xf32>
    %65 = vector.multi_reduction <add>, %64, %cst_28 [1] : vector<128x64xf32> to vector<128xf32>
    %66 = vector.shape_cast %65 : vector<128xf32> to vector<128x1xf32>
    %cst_29 = arith.constant 0.000000e+00 : f32
    %67 = vector.broadcast %cst_29 : f32 to vector<128x64xf32>
    %68 = arith.select %63, %64, %67 : vector<128x64xi1>, vector<128x64xf32>
    %cst_30 = arith.constant dense<0.000000e+00> : vector<128xf32>
    %69 = vector.multi_reduction <add>, %68, %cst_30 [1] : vector<128x64xf32> to vector<128xf32>
    %70 = vector.shape_cast %69 : vector<128xf32> to vector<128x1xf32>
    %71 = arith.subf %66, %70 : vector<128x1xf32>
    %cst_31 = arith.constant 1.000000e-24 : f32
    %72 = vector.broadcast %cst_31 : f32 to vector<128x1xf32>
    %73 = arith.maximumf %70, %72 : vector<128x1xf32>
    %74 = math.rsqrt %73 : vector<128x1xf32>
    %cst_32 = arith.constant 1.000000e-24 : f32
    %75 = vector.broadcast %cst_32 : f32 to vector<128x1xf32>
    %76 = arith.maximumf %71, %75 : vector<128x1xf32>
    %77 = math.rsqrt %76 : vector<128x1xf32>
    %78 = vector.shape_cast %74 : vector<128x1xf32> to vector<128x1xf32>
    %79 = vector.broadcast %78 : vector<128x1xf32> to vector<128x64xf32>
    %80 = vector.shape_cast %77 : vector<128x1xf32> to vector<128x1xf32>
    %81 = vector.broadcast %80 : vector<128x1xf32> to vector<128x64xf32>
    %82 = arith.select %63, %79, %81 : vector<128x64xi1>, vector<128x64xf32>
    %83 = arith.mulf %60, %82 : vector<128x64xf32>
    %c1_33 = arith.constant 1 : index
    %c0_34 = arith.constant 0 : index
    %84 = vector.load %arg6[%c1_33, %c0_34] : memref<3x64xf32, #tpu.memory_space<vmem>>, vector<1x64xf32>
    %c2 = arith.constant 2 : index
    %c0_35 = arith.constant 0 : index
    %85 = vector.load %arg6[%c2, %c0_35] : memref<3x64xf32, #tpu.memory_space<vmem>>, vector<1x64xf32>
    %cst_36 = arith.constant dense<0.000000e+00> : vector<128xf32>
    %86 = vector.multi_reduction <add>, %83, %cst_36 [1] : vector<128x64xf32> to vector<128xf32>
    %87 = vector.shape_cast %86 : vector<128xf32> to vector<128x1xf32>
    %cst_37 = arith.constant 6.400000e+01 : f32
    %88 = vector.broadcast %cst_37 : f32 to vector<128x1xf32>
    %89 = arith.divf %87, %88 : vector<128x1xf32>
    %90 = vector.broadcast %89 : vector<128x1xf32> to vector<128x64xf32>
    %91 = arith.subf %83, %90 : vector<128x64xf32>
    %92 = arith.mulf %91, %91 : vector<128x64xf32>
    %cst_38 = arith.constant dense<0.000000e+00> : vector<128xf32>
    %93 = vector.multi_reduction <add>, %92, %cst_38 [1] : vector<128x64xf32> to vector<128xf32>
    %94 = vector.shape_cast %93 : vector<128xf32> to vector<128x1xf32>
    %cst_39 = arith.constant 6.400000e+01 : f32
    %95 = vector.broadcast %cst_39 : f32 to vector<128x1xf32>
    %96 = arith.divf %94, %95 : vector<128x1xf32>
    %cst_40 = arith.constant 9.99999997E-7 : f32
    %97 = vector.broadcast %cst_40 : f32 to vector<128x1xf32>
    %98 = arith.addf %96, %97 : vector<128x1xf32>
    %99 = math.rsqrt %98 : vector<128x1xf32>
    %100 = vector.broadcast %99 : vector<128x1xf32> to vector<128x64xf32>
    %101 = arith.mulf %91, %100 : vector<128x64xf32>
    %102 = vector.broadcast %84 : vector<1x64xf32> to vector<128x64xf32>
    %103 = arith.mulf %101, %102 : vector<128x64xf32>
    %104 = vector.broadcast %85 : vector<1x64xf32> to vector<128x64xf32>
    %105 = arith.addf %103, %104 : vector<128x64xf32>
    %c0_41 = arith.constant 0 : index
    %c0_42 = arith.constant 0 : index
    %106 = vector.load %arg7[%c0_41, %c0_42] : memref<64x64xbf16, #tpu.memory_space<vmem>>, vector<64x64xbf16>
    %107 = arith.truncf %105 : vector<128x64xf32> to vector<128x64xbf16>
    %cst_43 = arith.constant dense<0.000000e+00> : vector<128x64xf32>
    %108 = tpu.matmul %107, %106, %cst_43 {dimension_numbers = #tpu.dot_dimension_numbers<[1], [0], [0], [1], [0, 0, 1, 1], [], []>} : vector<128x64xbf16>, vector<64x64xbf16>, vector<128x64xf32> -> vector<128x64xf32>
    %c0_44 = arith.constant 0 : index
    %c0_45 = arith.constant 0 : index
    %109 = vector.load %arg8[%c0_44, %c0_45] : memref<4x64xf32, #tpu.memory_space<vmem>>, vector<1x64xf32>
    %110 = vector.broadcast %109 : vector<1x64xf32> to vector<128x64xf32>
    %111 = arith.addf %108, %110 : vector<128x64xf32>
    %cst_46 = arith.constant 0.000000e+00 : f32
    %112 = vector.broadcast %cst_46 : f32 to vector<128x64xf32>
    %113 = arith.cmpf oge, %111, %112 : vector<128x64xf32>
    %cst_47 = arith.constant 0.00999999977 : f32
    %114 = vector.broadcast %cst_47 : f32 to vector<128x64xf32>
    %115 = arith.mulf %114, %111 : vector<128x64xf32>
    %116 = arith.select %113, %111, %115 : vector<128x64xi1>, vector<128x64xf32>
    %c1_48 = arith.constant 1 : index
    %c0_49 = arith.constant 0 : index
    %117 = vector.load %arg8[%c1_48, %c0_49] : memref<4x64xf32, #tpu.memory_space<vmem>>, vector<1x64xf32>
    %c2_50 = arith.constant 2 : index
    %c0_51 = arith.constant 0 : index
    %118 = vector.load %arg8[%c2_50, %c0_51] : memref<4x64xf32, #tpu.memory_space<vmem>>, vector<1x64xf32>
    %cst_52 = arith.constant dense<0.000000e+00> : vector<128xf32>
    %119 = vector.multi_reduction <add>, %116, %cst_52 [1] : vector<128x64xf32> to vector<128xf32>
    %120 = vector.shape_cast %119 : vector<128xf32> to vector<128x1xf32>
    %cst_53 = arith.constant 6.400000e+01 : f32
    %121 = vector.broadcast %cst_53 : f32 to vector<128x1xf32>
    %122 = arith.divf %120, %121 : vector<128x1xf32>
    %123 = vector.broadcast %122 : vector<128x1xf32> to vector<128x64xf32>
    %124 = arith.subf %116, %123 : vector<128x64xf32>
    %125 = arith.mulf %124, %124 : vector<128x64xf32>
    %cst_54 = arith.constant dense<0.000000e+00> : vector<128xf32>
    %126 = vector.multi_reduction <add>, %125, %cst_54 [1] : vector<128x64xf32> to vector<128xf32>
    %127 = vector.shape_cast %126 : vector<128xf32> to vector<128x1xf32>
    %cst_55 = arith.constant 6.400000e+01 : f32
    %128 = vector.broadcast %cst_55 : f32 to vector<128x1xf32>
    %129 = arith.divf %127, %128 : vector<128x1xf32>
    %cst_56 = arith.constant 9.99999997E-7 : f32
    %130 = vector.broadcast %cst_56 : f32 to vector<128x1xf32>
    %131 = arith.addf %129, %130 : vector<128x1xf32>
    %132 = math.rsqrt %131 : vector<128x1xf32>
    %133 = vector.broadcast %132 : vector<128x1xf32> to vector<128x64xf32>
    %134 = arith.mulf %124, %133 : vector<128x64xf32>
    %135 = vector.broadcast %117 : vector<1x64xf32> to vector<128x64xf32>
    %136 = arith.mulf %134, %135 : vector<128x64xf32>
    %137 = vector.broadcast %118 : vector<1x64xf32> to vector<128x64xf32>
    %138 = arith.addf %136, %137 : vector<128x64xf32>
    %c3 = arith.constant 3 : index
    %c0_57 = arith.constant 0 : index
    %139 = vector.load %arg8[%c3, %c0_57] : memref<4x64xf32, #tpu.memory_space<vmem>>, vector<1x64xf32>
    %140 = vector.broadcast %139 : vector<1x64xf32> to vector<128x64xf32>
    %141 = arith.mulf %138, %140 : vector<128x64xf32>
    %cst_58 = arith.constant dense<0.000000e+00> : vector<128xf32>
    %142 = vector.multi_reduction <add>, %141, %cst_58 [1] : vector<128x64xf32> to vector<128xf32>
    %143 = vector.shape_cast %142 : vector<128xf32> to vector<128x1xf32>
    %c0_59 = arith.constant 0 : index
    %c0_60 = arith.constant 0 : index
    %144 = vector.load %arg9[%c0_59, %c0_60] : memref<1x1xf32, #tpu.memory_space<vmem>>, vector<1x1xf32>
    %145 = vector.broadcast %144 : vector<1x1xf32> to vector<128x1xf32>
    %146 = arith.addf %143, %145 : vector<128x1xf32>
    %c0_61 = arith.constant 0 : index
    %c0_62 = arith.constant 0 : index
    %147 = vector.load %arg10[%c0_61, %c0_62] : memref<128x1xf32, #tpu.memory_space<vmem>>, vector<128x1xf32>
    tpu.vector_store %arg10[%c0_61, %c0_62], %146 {strides = array<i32>} : memref<128x1xf32, #tpu.memory_space<vmem>>, vector<128x1xf32>,
    return
  }
  func.func @transform_0(%arg0: i32) -> (i32, i32) {
    %c0_i32 = arith.constant 0 : i32
    %c0_i32_0 = arith.constant 0 : i32
    return %arg0, %c0_i32 : i32, i32
  }
  func.func @transform_1(%arg0: i32) -> (i32, i32) {
    %c0_i32 = arith.constant 0 : i32
    %c0_i32_0 = arith.constant 0 : i32
    return %arg0, %c0_i32 : i32, i32
  }
  func.func @transform_2(%arg0: i32) -> (i32, i32) {
    %c0_i32 = arith.constant 0 : i32
    %c0_i32_0 = arith.constant 0 : i32
    %c0_i32_1 = arith.constant 0 : i32
    return %c0_i32, %c0_i32_0 : i32, i32
  }
  func.func @transform_3(%arg0: i32) -> (i32, i32) {
    %c0_i32 = arith.constant 0 : i32
    %c0_i32_0 = arith.constant 0 : i32
    %c0_i32_1 = arith.constant 0 : i32
    return %c0_i32, %c0_i32_0 : i32, i32
  }
  func.func @transform_4(%arg0: i32) -> (i32, i32) {
    %c0_i32 = arith.constant 0 : i32
    %c0_i32_0 = arith.constant 0 : i32
    %c0_i32_1 = arith.constant 0 : i32
    return %c0_i32, %c0_i32_0 : i32, i32
  }
  func.func @transform_5(%arg0: i32) -> (i32, i32) {
    %c0_i32 = arith.constant 0 : i32
    %c0_i32_0 = arith.constant 0 : i32
    %c0_i32_1 = arith.constant 0 : i32
    return %c0_i32, %c0_i32_0 : i32, i32
  }
  func.func @transform_6(%arg0: i32) -> (i32, i32) {
    %c0_i32 = arith.constant 0 : i32
    %c0_i32_0 = arith.constant 0 : i32
    %c0_i32_1 = arith.constant 0 : i32
    return %c0_i32, %c0_i32_0 : i32, i32
  }
  func.func @transform_7(%arg0: i32) -> (i32, i32) {
    %c0_i32 = arith.constant 0 : i32
    %c0_i32_0 = arith.constant 0 : i32
    %c0_i32_1 = arith.constant 0 : i32
    return %c0_i32, %c0_i32_0 : i32, i32
  }
  func.func @transform_8(%arg0: i32) -> (i32, i32) {
    %c0_i32 = arith.constant 0 : i32
    %c0_i32_0 = arith.constant 0 : i32
    %c0_i32_1 = arith.constant 0 : i32
    return %c0_i32, %c0_i32_0 : i32, i32
  }
  func.func @transform_9(%arg0: i32) -> (i32, i32) {
    %c0_i32 = arith.constant 0 : i32
    %c0_i32_0 = arith.constant 0 : i32
    return %arg0, %c0_i32 : i32, i32
  }
}

</mosaic_0001>

<llo_original>
// kernel: tpu_custom_call.1
$region0: #{tpu_custom_call.1}
  #allocation0 [shape = 'u32[]', space=smem, size = 0x4, offset = 0x4, fixed_abs, tag = 'smem constant byte address 0x4 - core index']
  #allocation1 [shape = 'u32[144,128]{1,0:T(1,128)}', space=vmem, size = 0x12000, scoped, tag = 'internal scratch']
  #allocation2 [shape = 'f32[1,1]{1,0:T(1,128)S(1)}', space=vmem, size = 0x200, scoped, tag = 'scoped memory for tpu_custom_call.1']
  %s0 = inlined_call_operand.vmem [shape: f32[256,64], index: 0, kind: input, shape index: {}]
  %s1 = inlined_call_operand.vmem [shape: f32[256,32], index: 1, kind: input, shape index: {}]
  %s2 = inlined_call_operand.vmem [shape: f32[2,64], index: 2, kind: input, shape index: {}]
  %s3 = inlined_call_operand.vmem [shape: f32[2,32], index: 3, kind: input, shape index: {}]
  %s4 = inlined_call_operand.vmem [shape: bf16[96,64], index: 4, kind: input, shape index: {}]
  %s5 = inlined_call_operand.vmem [shape: f32[3,64], index: 5, kind: input, shape index: {}]
  %s6 = inlined_call_operand.vmem [shape: bf16[64,64], index: 6, kind: input, shape index: {}]
  %s7 = inlined_call_operand.vmem [shape: f32[4,64], index: 7, kind: input, shape index: {}]
  %s8 = inlined_call_operand.<no memory space> [shape: f32[1,1], index: 8, kind: input, shape index: {}]
  %s9 = inlined_call_operand.vmem [shape: f32[256,1], index: 9, kind: output, shape index: {}]
  %s10 = sld [smem:[#allocation0]]
  $region69: #{tpu_custom_call.1} parent=0
    _
  %s12 = ssub.s32 1, %s10
  %s13 = scalar_select 0, %s12, %s10
  %v14 = vstv %s8
  %15 = vst [vmem:[#allocation2] sm:$0x1] %v14
  loop: start=0, step=1, limit=4
  $region2: #{tpu_custom_call.1} parent=0 // loop_pre_header
    _
  $region3: #{tpu_custom_call.1} parent=0 // loop_header
    %s17 = sphi 0, %s21
    %p18 = scmp.ge.s32.totalorder %s17, 4
    %s27 = sphi 0, %s29
    %s30 = sphi 0, %s27
    %s31 = sphi 0, %s30
    %s47 = sphi 0, %s31
    %s53 = sphi 0, %s55
    %s56 = sphi 0, %s53
    %s57 = sphi 0, %s56
    %s73 = sphi 0, %s57
    %s77 = sphi 0, %s77
    %s79 = sphi 0, %s77
    %s80 = sphi 0, %s79
    %s94 = sphi 0, %s80
    %s98 = sphi 0, %s98
    %s100 = sphi 0, %s98
    %s101 = sphi 0, %s100
    %s115 = sphi 0, %s101
    %s119 = sphi 0, %s119
    %s121 = sphi 0, %s119
    %s122 = sphi 0, %s121
    %s136 = sphi 0, %s122
    %s140 = sphi 0, %s140
    %s142 = sphi 0, %s140
    %s143 = sphi 0, %s142
    %s157 = sphi 0, %s143
    %s161 = sphi 0, %s161
    %s163 = sphi 0, %s161
    %s164 = sphi 0, %s163
    %s178 = sphi 0, %s164
    %s182 = sphi 0, %s182
    %s184 = sphi 0, %s182
    %s185 = sphi 0, %s184
    %s199 = sphi 0, %s185
    %s203 = sphi 0, %s203
    %s205 = sphi 0, %s203
    %s206 = sphi 0, %s205
    %s220 = sphi 0, %s206
    %s226 = sphi 0, %s228
    %s229 = sphi 0, %s226
    %s230 = sphi 0, %s229
    %s246 = sphi 0, %s230
  $region4: #{tpu_custom_call.1} parent=0 // loop_header_branch
    %20 = sbr.rel (%p18) target = $region8
  $region5: #{tpu_custom_call.1} parent=0 // loop_body
    %s22 = ssub.s32 %s17, 1
    %s23 = ssub.s32 %s17, 2
    %s24 = sadd.s32 %s17, 1
    %s25 = ssub.s32 %s17, %s24
    %p26 = scmp.eq.s32.totalorder %s25, 0
    %s28 = sadd.s32 %s27, 1
    %s29 = scalar_select %p26, %s27, %s28
    %p32 = pneg %p26
    %p33 = scmp.eq.s32.totalorder %s17, 1
    %p34 = por %p32, %p33
    %p35 = scmp.ne.s32.totalorder %s27, %s30
    %p36 = scmp.eq.s32.totalorder %s17, 0
    %p37 = por %p35, %p36
    %p38 = scmp.ne.s32.totalorder %s27, %s30
    %p39 = scmp.eq.s32.totalorder %s22, 1
    %p40 = por %p38, %p39
    %p41 = scmp.ne.s32.totalorder %s30, %s31
    %p42 = scmp.eq.s32.totalorder %s22, 0
    %p43 = por %p41, %p42
    %p44 = scmp.ne.s32.totalorder %s30, %s31
    %p45 = scmp.eq.s32.totalorder %s23, 1
    %p46 = por %p44, %p45
    %p48 = scmp.ne.s32.totalorder %s31, %s47
    %p49 = scmp.eq.s32.totalorder %s23, 0
    %p50 = por %p48, %p49
    %s51 = ssub.s32 %s17, %s24
    %p52 = scmp.eq.s32.totalorder %s51, 0
    %s54 = sadd.s32 %s53, 1
    %s55 = scalar_select %p52, %s53, %s54
    %p58 = pneg %p52
    %p59 = scmp.eq.s32.totalorder %s17, 1
    %p60 = por %p58, %p59
    %p61 = scmp.ne.s32.totalorder %s53, %s56
    %p62 = scmp.eq.s32.totalorder %s17, 0
    %p63 = por %p61, %p62
    %p64 = scmp.ne.s32.totalorder %s53, %s56
    %p65 = scmp.eq.s32.totalorder %s22, 1
    %p66 = por %p64, %p65
    %p67 = scmp.ne.s32.totalorder %s56, %s57
    %p68 = scmp.eq.s32.totalorder %s22, 0
    %p69 = por %p67, %p68
    %p70 = scmp.ne.s32.totalorder %s56, %s57
    %p71 = scmp.eq.s32.totalorder %s23, 1
    %p72 = por %p70, %p71
    %p74 = scmp.ne.s32.totalorder %s57, %s73
    %p75 = scmp.eq.s32.totalorder %s23, 0
    %p76 = por %p74, %p75
    %s78 = sadd.s32 %s77, 1
    %p81 = scmp.eq.s32.totalorder %s17, 1
    %p82 = scmp.ne.s32.totalorder %s77, %s79
    %p83 = scmp.eq.s32.totalorder %s17, 0
    %p84 = por %p82, %p83
    %p85 = scmp.ne.s32.totalorder %s77, %s79
    %p86 = scmp.eq.s32.totalorder %s22, 1
    %p87 = por %p85, %p86
    %p88 = scmp.ne.s32.totalorder %s79, %s80
    %p89 = scmp.eq.s32.totalorder %s22, 0
    %p90 = por %p88, %p89
    %p91 = scmp.ne.s32.totalorder %s79, %s80
    %p92 = scmp.eq.s32.totalorder %s23, 1
    %p93 = por %p91, %p92
    %p95 = scmp.ne.s32.totalorder %s80, %s94
    %p96 = scmp.eq.s32.totalorder %s23, 0
    %p97 = por %p95, %p96
    %s99 = sadd.s32 %s98, 1
    %p102 = scmp.eq.s32.totalorder %s17, 1
    %p103 = scmp.ne.s32.totalorder %s98, %s100
    %p104 = scmp.eq.s32.totalorder %s17, 0
    %p105 = por %p103, %p104
    %p106 = scmp.ne.s32.totalorder %s98, %s100
    %p107 = scmp.eq.s32.totalorder %s22, 1
    %p108 = por %p106, %p107
    %p109 = scmp.ne.s32.totalorder %s100, %s101
    %p110 = scmp.eq.s32.totalorder %s22, 0
    %p111 = por %p109, %p110
    %p112 = scmp.ne.s32.totalorder %s100, %s101
    %p113 = scmp.eq.s32.totalorder %s23, 1
    %p114 = por %p112, %p113
    %p116 = scmp.ne.s32.totalorder %s101, %s115
    %p117 = scmp.eq.s32.totalorder %s23, 0
    %p118 = por %p116, %p117
    %s120 = sadd.s32 %s119, 1
    %p123 = scmp.eq.s32.totalorder %s17, 1
    %p124 = scmp.ne.s32.totalorder %s119, %s121
    %p125 = scmp.eq.s32.totalorder %s17, 0
    %p126 = por %p124, %p125
    %p127 = scmp.ne.s32.totalorder %s119, %s121
    %p128 = scmp.eq.s32.totalorder %s22, 1
    %p129 = por %p127, %p128
    %p130 = scmp.ne.s32.totalorder %s121, %s122
    %p131 = scmp.eq.s32.totalorder %s22, 0
    %p132 = por %p130, %p131
    %p133 = scmp.ne.s32.totalorder %s121, %s122
    %p134 = scmp.eq.s32.totalorder %s23, 1
    %p135 = por %p133, %p134
    %p137 = scmp.ne.s32.totalorder %s122, %s136
    %p138 = scmp.eq.s32.totalorder %s23, 0
    %p139 = por %p137, %p138
    %s141 = sadd.s32 %s140, 1
    %p144 = scmp.eq.s32.totalorder %s17, 1
    %p145 = scmp.ne.s32.totalorder %s140, %s142
    %p146 = scmp.eq.s32.totalorder %s17, 0
    %p147 = por %p145, %p146
    %p148 = scmp.ne.s32.totalorder %s140, %s142
    %p149 = scmp.eq.s32.totalorder %s22, 1
    %p150 = por %p148, %p149
    %p151 = scmp.ne.s32.totalorder %s142, %s143
    %p152 = scmp.eq.s32.totalorder %s22, 0
    %p153 = por %p151, %p152
    %p154 = scmp.ne.s32.totalorder %s142, %s143
    %p155 = scmp.eq.s32.totalorder %s23, 1
    %p156 = por %p154, %p155
    %p158 = scmp.ne.s32.totalorder %s143, %s157
    %p159 = scmp.eq.s32.totalorder %s23, 0
    %p160 = por %p158, %p159
    %s162 = sadd.s32 %s161, 1
    %p165 = scmp.eq.s32.totalorder %s17, 1
    %p166 = scmp.ne.s32.totalorder %s161, %s163
    %p167 = scmp.eq.s32.totalorder %s17, 0
    %p168 = por %p166, %p167
    %p169 = scmp.ne.s32.totalorder %s161, %s163
    %p170 = scmp.eq.s32.totalorder %s22, 1
    %p171 = por %p169, %p170
    %p172 = scmp.ne.s32.totalorder %s163, %s164
    %p173 = scmp.eq.s32.totalorder %s22, 0
    %p174 = por %p172, %p173
    %p175 = scmp.ne.s32.totalorder %s163, %s164
    %p176 = scmp.eq.s32.totalorder %s23, 1
    %p177 = por %p175, %p176
    %p179 = scmp.ne.s32.totalorder %s164, %s178
    %p180 = scmp.eq.s32.totalorder %s23, 0
    %p181 = por %p179, %p180
    %s183 = sadd.s32 %s182, 1
    %p186 = scmp.eq.s32.totalorder %s17, 1
    %p187 = scmp.ne.s32.totalorder %s182, %s184
    %p188 = scmp.eq.s32.totalorder %s17, 0
    %p189 = por %p187, %p188
    %p190 = scmp.ne.s32.totalorder %s182, %s184
    %p191 = scmp.eq.s32.totalorder %s22, 1
    %p192 = por %p190, %p191
    %p193 = scmp.ne.s32.totalorder %s184, %s185
    %p194 = scmp.eq.s32.totalorder %s22, 0
    %p195 = por %p193, %p194
    %p196 = scmp.ne.s32.totalorder %s184, %s185
    %p197 = scmp.eq.s32.totalorder %s23, 1
    %p198 = por %p196, %p197
    %p200 = scmp.ne.s32.totalorder %s185, %s199
    %p201 = scmp.eq.s32.totalorder %s23, 0
    %p202 = por %p200, %p201
    %s204 = sadd.s32 %s203, 1
    %p207 = scmp.eq.s32.totalorder %s17, 1
    %p208 = scmp.ne.s32.totalorder %s203, %s205
    %p209 = scmp.eq.s32.totalorder %s17, 0
    %p210 = por %p208, %p209
    %p211 = scmp.ne.s32.totalorder %s203, %s205
    %p212 = scmp.eq.s32.totalorder %s22, 1
    %p213 = por %p211, %p212
    %p214 = scmp.ne.s32.totalorder %s205, %s206
    %p215 = scmp.eq.s32.totalorder %s22, 0
    %p216 = por %p214, %p215
    %p217 = scmp.ne.s32.totalorder %s205, %s206
    %p218 = scmp.eq.s32.totalorder %s23, 1
    %p219 = por %p217, %p218
    %p221 = scmp.ne.s32.totalorder %s206, %s220
    %p222 = scmp.eq.s32.totalorder %s23, 0
    %p223 = por %p221, %p222
    %s224 = ssub.s32 %s17, %s24
    %p225 = scmp.eq.s32.totalorder %s224, 0
    %s227 = sadd.s32 %s226, 1
    %s228 = scalar_select %p225, %s226, %s227
    %p231 = pneg %p225
    %p232 = scmp.eq.s32.totalorder %s17, 1
    %p233 = por %p231, %p232
    %p234 = scmp.ne.s32.totalorder %s226, %s229
    %p235 = scmp.eq.s32.totalorder %s17, 0
    %p236 = por %p234, %p235
    %p237 = scmp.ne.s32.totalorder %s226, %s229
    %p238 = scmp.eq.s32.totalorder %s22, 1
    %p239 = por %p237, %p238
    %p240 = scmp.ne.s32.totalorder %s229, %s230
    %p241 = scmp.eq.s32.totalorder %s22, 0
    %p242 = por %p240, %p241
    %p243 = scmp.ne.s32.totalorder %s229, %s230
    %p244 = scmp.eq.s32.totalorder %s23, 1
    %p245 = por %p243, %p244
    %p247 = scmp.ne.s32.totalorder %s230, %s246
    %p248 = scmp.eq.s32.totalorder %s23, 0
    %p249 = por %p247, %p248
    %p250 = scmp.le.s32.totalorder 1, %s17
    %p251 = scmp.lt.s32.totalorder %s17, 3
    %p252 = pnand %p250, %p251
    %p253 = pneg %p252
    // Predicated region
    $region9: #{tpu_custom_call.1} parent=5 // pred_check
      _
    $region10: #{tpu_custom_call.1} parent=5 // pred_check_branch
      %255 = sbr.rel (%p252) target = $region12
    $region11: #{tpu_custom_call.1} parent=5 // pred_region
      %s256 = ssub.s32 %s17, 1
      // Predicated region
      $region13: #{tpu_custom_call.1} parent=11 // pred_check
        %p257 = pneg %p90
      $region14: #{tpu_custom_call.1} parent=11 // pred_check_branch
        %259 = sbr.rel (%p257) target = $region16
      $region15: #{tpu_custom_call.1} parent=11 // pred_region
        _
      $region16: #{tpu_custom_call.1} parent=11 // pred_fallthru
        _
      // Predicated region
      $region17: #{tpu_custom_call.1} parent=11 // pred_check
        %p260 = pneg %p111
      $region18: #{tpu_custom_call.1} parent=11 // pred_check_branch
        %262 = sbr.rel (%p260) target = $region20
      $region19: #{tpu_custom_call.1} parent=11 // pred_region
        _
      $region20: #{tpu_custom_call.1} parent=11 // pred_fallthru
        _
      // Predicated region
      $region21: #{tpu_custom_call.1} parent=11 // pred_check
        %p263 = pneg %p132
      $region22: #{tpu_custom_call.1} parent=11 // pred_check_branch
        %265 = sbr.rel (%p263) target = $region24
      $region23: #{tpu_custom_call.1} parent=11 // pred_region
        _
      $region24: #{tpu_custom_call.1} parent=11 // pred_fallthru
        _
      // Predicated region
      $region25: #{tpu_custom_call.1} parent=11 // pred_check
        %p266 = pneg %p153
      $region26: #{tpu_custom_call.1} parent=11 // pred_check_branch
        %268 = sbr.rel (%p266) target = $region28
      $region27: #{tpu_custom_call.1} parent=11 // pred_region
        _
      $region28: #{tpu_custom_call.1} parent=11 // pred_fallthru
        _
      // Predicated region
      $region29: #{tpu_custom_call.1} parent=11 // pred_check
        %p269 = pneg %p174
      $region30: #{tpu_custom_call.1} parent=11 // pred_check_branch
        %271 = sbr.rel (%p269) target = $region32
      $region31: #{tpu_custom_call.1} parent=11 // pred_region
        _
      $region32: #{tpu_custom_call.1} parent=11 // pred_fallthru
        _
      // Predicated region
      $region33: #{tpu_custom_call.1} parent=11 // pred_check
        %p272 = pneg %p195
      $region34: #{tpu_custom_call.1} parent=11 // pred_check_branch
        %274 = sbr.rel (%p272) target = $region36
      $region35: #{tpu_custom_call.1} parent=11 // pred_region
        _
      $region36: #{tpu_custom_call.1} parent=11 // pred_fallthru
        _
      // Predicated region
      $region37: #{tpu_custom_call.1} parent=11 // pred_check
        %p275 = pneg %p216
      $region38: #{tpu_custom_call.1} parent=11 // pred_check_branch
        %277 = sbr.rel (%p275) target = $region40
      $region39: #{tpu_custom_call.1} parent=11 // pred_region
        _
      $region40: #{tpu_custom_call.1} parent=11 // pred_fallthru
        _
    $region12: #{tpu_custom_call.1} parent=5 // pred_fallthru
      _
    %p278 = scmp.lt.s32.totalorder %s17, 2
    // Predicated region
    $region41: #{tpu_custom_call.1} parent=5 // pred_check
      %p279 = pneg %p278
    $region42: #{tpu_custom_call.1} parent=5 // pred_check_branch
      %281 = sbr.rel (%p279) target = $region44
    $region43: #{tpu_custom_call.1} parent=5 // pred_region
      // Predicated region
      $region45: #{tpu_custom_call.1} parent=43 // pred_check
        %p282 = pneg %p37
      $region46: #{tpu_custom_call.1} parent=43 // pred_check_branch
        %284 = sbr.rel (%p282) target = $region48
      $region47: #{tpu_custom_call.1} parent=43 // pred_region
        %s285 = smul.u32 16, %s17
        %p286 = scmp.lt.s32.totalorder %s285, 31
        %s287 = scalar_select %p286, %s285, 31
        %s288 = smul.addr %s287, 8
        %s289 = scalar_lea.vmem %s0, %s288
        %s290 = smul.u32 16, %s17
      $region48: #{tpu_custom_call.1} parent=43 // pred_fallthru
        _
      // Predicated region
      $region49: #{tpu_custom_call.1} parent=43 // pred_check
        %p291 = pneg %p63
      $region50: #{tpu_custom_call.1} parent=43 // pred_check_branch
        %293 = sbr.rel (%p291) target = $region52
      $region51: #{tpu_custom_call.1} parent=43 // pred_region
        %s294 = smul.u32 16, %s17
        %p295 = scmp.lt.s32.totalorder %s294, 31
        %s296 = scalar_select %p295, %s294, 31
        %s297 = smul.addr %s296, 8
        %s298 = scalar_lea.vmem %s1, %s297
        %s299 = smul.u32 16, %s17
      $region52: #{tpu_custom_call.1} parent=43 // pred_fallthru
        _
    $region44: #{tpu_custom_call.1} parent=5 // pred_fallthru
      _
    %p300 = scmp.le.s32.totalorder 1, %s17
    %p301 = scmp.lt.s32.totalorder %s17, 3
    %p302 = pnand %p300, %p301
    %p303 = pneg %p302
    // Predicated region
    $region53: #{tpu_custom_call.1} parent=5 // pred_check
      _
    $region54: #{tpu_custom_call.1} parent=5 // pred_check_branch
      %305 = sbr.rel (%p302) target = $region56
    $region55: #{tpu_custom_call.1} parent=5 // pred_region
      %s306 = ssub.s32 %s17, 1
      %s307 = smul.u32 16, %s22
      %p308 = scmp.lt.s32.totalorder %s307, 31
      %s309 = scalar_select %p308, %s307, 31
      %s310 = smul.addr %s309, 8
      %s311 = scalar_lea.vmem %s0, %s310
      %p312 = pneg %p43
      %p313 = pneg %p40
      %s314 = smul.u32 16, %s22
      %p315 = scmp.lt.s32.totalorder %s314, 31
      %s316 = scalar_select %p315, %s314, 31
      %s317 = smul.addr %s316, 8
      %s318 = scalar_lea.vmem %s1, %s317
      %p319 = pneg %p69
      %p320 = pneg %p66
      %p321 = pneg %p90
      %p322 = pneg %p87
      %p323 = pneg %p111
      %p324 = pneg %p108
      %p325 = pneg %p132
      %p326 = pneg %p129
      %p327 = pneg %p153
      %p328 = pneg %p150
      %p329 = pneg %p174
      %p330 = pneg %p171
      %p331 = pneg %p195
      %p332 = pneg %p192
      %p333 = pneg %p216
      %p334 = pneg %p213
      %p335 = pneg %p242
      %p336 = pneg %p239
      %s337 = smul.u32 16, %s22
      %p338 = scmp.lt.s32.totalorder %s337, 31
      %s339 = scalar_select %p338, %s337, 31
      %s340 = smul.addr %s339, 8
      %s341 = scalar_lea.vmem %s9, %s340
      %s342 = smul.u32 16, %s22
      %p343 = scmp.lt.s32.totalorder %s342, 31
      %s344 = scalar_select %p343, %s342, 31
      %s345 = smul.addr %s344, 8
      %s346 = scalar_lea.vmem %s0, %s345
      %s347 = smul.u32 16, %s22
      %s348 = smul.u32 16, %s22
      %p349 = scmp.lt.s32.totalorder %s348, 31
      %s350 = scalar_select %p349, %s348, 31
      %s351 = smul.addr %s350, 8
      %s352 = scalar_lea.vmem %s1, %s351
      %s353 = smul.u32 16, %s22
      %s354 = smul.u32 16, %s22
      %p355 = scmp.lt.s32.totalorder %s354, 31
      %s356 = scalar_select %p355, %s354, 31
      %s357 = smul.addr %s356, 8
      %s358 = scalar_lea.vmem %s9, %s357
      %s359 = smul.u32 16, %s22
      %v361 = vld [vmem:[%s346] sm:$0xff]
      %v362 = vld [vmem:[%s346 + $0x8] sm:$0xff]
      %v363 = vld [vmem:[%s346 + $0x10] sm:$0xff]
      %v364 = vld [vmem:[%s346 + $0x18] sm:$0xff]
      %v365 = vld [vmem:[%s346 + $0x20] sm:$0xff]
      %v366 = vld [vmem:[%s346 + $0x28] sm:$0xff]
      %v367 = vld [vmem:[%s346 + $0x30] sm:$0xff]
      %v368 = vld [vmem:[%s346 + $0x38] sm:$0xff]
      %v369 = vld [vmem:[%s346 + $0x40] sm:$0xff]
      %v370 = vld [vmem:[%s346 + $0x48] sm:$0xff]
      %v371 = vld [vmem:[%s346 + $0x50] sm:$0xff]
      %v372 = vld [vmem:[%s346 + $0x58] sm:$0xff]
      %v373 = vld [vmem:[%s346 + $0x60] sm:$0xff]
      %v374 = vld [vmem:[%s346 + $0x68] sm:$0xff]
      %v375 = vld [vmem:[%s346 + $0x70] sm:$0xff]
      %v376 = vld [vmem:[%s346 + $0x78] sm:$0xff]
      %v377 = vld [vmem:[%s2] sm:$0x1]
      %v378 = vld [vmem:[%s2 + $0x1] sm:$0x1]
      %vm379 = vcmask 523264
      %v380 = vsel %vm379, %v361, 0.0
      %381 = vadd.xlane.f32.xlu0 %v380
      %v382 = vpop.xlane.xlu0 %381
      %v383 = vsel %vm379, %v362, 0.0
      %384 = vadd.xlane.f32.xlu0 %v383
      %v385 = vpop.xlane.xlu0 %384
      %v386 = vsel %vm379, %v363, 0.0
      %387 = vadd.xlane.f32.xlu0 %v386
      %v388 = vpop.xlane.xlu0 %387
      %v389 = vsel %vm379, %v364, 0.0
      %390 = vadd.xlane.f32.xlu0 %v389
      %v391 = vpop.xlane.xlu0 %390
      %v392 = vsel %vm379, %v365, 0.0
      %393 = vadd.xlane.f32.xlu0 %v392
      %v394 = vpop.xlane.xlu0 %393
      %v395 = vsel %vm379, %v366, 0.0
      %396 = vadd.xlane.f32.xlu0 %v395
      %v397 = vpop.xlane.xlu0 %396
      %v398 = vsel %vm379, %v367, 0.0
      %399 = vadd.xlane.f32.xlu0 %v398
      %v400 = vpop.xlane.xlu0 %399
      %v401 = vsel %vm379, %v368, 0.0
      %402 = vadd.xlane.f32.xlu0 %v401
      %v403 = vpop.xlane.xlu0 %402
      %v404 = vsel %vm379, %v369, 0.0
      %405 = vadd.xlane.f32.xlu0 %v404
      %v406 = vpop.xlane.xlu0 %405
      %v407 = vsel %vm379, %v370, 0.0
      %408 = vadd.xlane.f32.xlu0 %v407
      %v409 = vpop.xlane.xlu0 %408
      %v410 = vsel %vm379, %v371, 0.0
      %411 = vadd.xlane.f32.xlu0 %v410
      %v412 = vpop.xlane.xlu0 %411
      %v413 = vsel %vm379, %v372, 0.0
      %414 = vadd.xlane.f32.xlu0 %v413
      %v415 = vpop.xlane.xlu0 %414
      %v416 = vsel %vm379, %v373, 0.0
      %417 = vadd.xlane.f32.xlu0 %v416
      %v418 = vpop.xlane.xlu0 %417
      %v419 = vsel %vm379, %v374, 0.0
      %420 = vadd.xlane.f32.xlu0 %v419
      %v421 = vpop.xlane.xlu0 %420
      %v422 = vsel %vm379, %v375, 0.0
      %423 = vadd.xlane.f32.xlu0 %v422
      %v424 = vpop.xlane.xlu0 %423
      %v425 = vsel %vm379, %v376, 0.0
      %426 = vadd.xlane.f32.xlu0 %v425
      %v427 = vpop.xlane.xlu0 %426
      %v428 = vrcp.pop 64.0
      %v429 = vmul.f32 %v382, %v428
      %v430 = vmul.f32 %v385, %v428
      %v431 = vmul.f32 %v388, %v428
      %v432 = vmul.f32 %v391, %v428
      %v433 = vmul.f32 %v394, %v428
      %v434 = vmul.f32 %v397, %v428
      %v435 = vmul.f32 %v400, %v428
      %v436 = vmul.f32 %v403, %v428
      %v437 = vmul.f32 %v406, %v428
      %v438 = vmul.f32 %v409, %v428
      %v439 = vmul.f32 %v412, %v428
      %v440 = vmul.f32 %v415, %v428
      %v441 = vmul.f32 %v418, %v428
      %v442 = vmul.f32 %v421, %v428
      %v443 = vmul.f32 %v424, %v428
      %v444 = vmul.f32 %v427, %v428
      %v445 = vsub.f32 %v361, %v429
      %v446 = vsub.f32 %v362, %v430
      %v447 = vsub.f32 %v363, %v431
      %v448 = vsub.f32 %v364, %v432
      %v449 = vsub.f32 %v365, %v433
      %v450 = vsub.f32 %v366, %v434
      %v451 = vsub.f32 %v367, %v435
      %v452 = vsub.f32 %v368, %v436
      %v453 = vsub.f32 %v369, %v437
      %v454 = vsub.f32 %v370, %v438
      %v455 = vsub.f32 %v371, %v439
      %v456 = vsub.f32 %v372, %v440
      %v457 = vsub.f32 %v373, %v441
      %v458 = vsub.f32 %v374, %v442
      %v459 = vsub.f32 %v375, %v443
      %v460 = vsub.f32 %v376, %v444
      %v461 = vmul.f32 %v445, %v445
      %v462 = vmul.f32 %v446, %v446
      %v463 = vmul.f32 %v447, %v447
      %v464 = vmul.f32 %v448, %v448
      %v465 = vmul.f32 %v449, %v449
      %v466 = vmul.f32 %v450, %v450
      %v467 = vmul.f32 %v451, %v451
      %v468 = vmul.f32 %v452, %v452
      %v469 = vmul.f32 %v453, %v453
      %v470 = vmul.f32 %v454, %v454
      %v471 = vmul.f32 %v455, %v455
      %v472 = vmul.f32 %v456, %v456
      %v473 = vmul.f32 %v457, %v457
      %v474 = vmul.f32 %v458, %v458
      %v475 = vmul.f32 %v459, %v459
      %v476 = vmul.f32 %v460, %v460
      %v477 = vsel %vm379, %v461, 0.0
      %478 = vadd.xlane.f32.xlu0 %v477
      %v479 = vpop.xlane.xlu0 %478
      %v480 = vsel %vm379, %v462, 0.0
      %481 = vadd.xlane.f32.xlu0 %v480
      %v482 = vpop.xlane.xlu0 %481
      %v483 = vsel %vm379, %v463, 0.0
      %484 = vadd.xlane.f32.xlu0 %v483
      %v485 = vpop.xlane.xlu0 %484
      %v486 = vsel %vm379, %v464, 0.0
      %487 = vadd.xlane.f32.xlu0 %v486
      %v488 = vpop.xlane.xlu0 %487
      %v489 = vsel %vm379, %v465, 0.0
      %490 = vadd.xlane.f32.xlu0 %v489
      %v491 = vpop.xlane.xlu0 %490
      %v492 = vsel %vm379, %v466, 0.0
      %493 = vadd.xlane.f32.xlu0 %v492
      %v494 = vpop.xlane.xlu0 %493
      %v495 = vsel %vm379, %v467, 0.0
      %496 = vadd.xlane.f32.xlu0 %v495
      %v497 = vpop.xlane.xlu0 %496
      %v498 = vsel %vm379, %v468, 0.0
      %499 = vadd.xlane.f32.xlu0 %v498
      %v500 = vpop.xlane.xlu0 %499
      %v501 = vsel %vm379, %v469, 0.0
      %502 = vadd.xlane.f32.xlu0 %v501
      %v503 = vpop.xlane.xlu0 %502
      %v504 = vsel %vm379, %v470, 0.0
      %505 = vadd.xlane.f32.xlu0 %v504
      %v506 = vpop.xlane.xlu0 %505
      %v507 = vsel %vm379, %v471, 0.0
      %508 = vadd.xlane.f32.xlu0 %v507
      %v509 = vpop.xlane.xlu0 %508
      %v510 = vsel %vm379, %v472, 0.0
      %511 = vadd.xlane.f32.xlu0 %v510
      %v512 = vpop.xlane.xlu0 %511
      %v513 = vsel %vm379, %v473, 0.0
      %514 = vadd.xlane.f32.xlu0 %v513
      %v515 = vpop.xlane.xlu0 %514
      %v516 = vsel %vm379, %v474, 0.0
      %517 = vadd.xlane.f32.xlu0 %v516
      %v518 = vpop.xlane.xlu0 %517
      %v519 = vsel %vm379, %v475, 0.0
      %520 = vadd.xlane.f32.xlu0 %v519
      %v521 = vpop.xlane.xlu0 %520
      %v522 = vsel %vm379, %v476, 0.0
      %523 = vadd.xlane.f32.xlu0 %v522
      %v524 = vpop.xlane.xlu0 %523
      %v525 = vmul.f32 %v479, %v428
      %v526 = vmul.f32 %v482, %v428
      %v527 = vmul.f32 %v485, %v428
      %v528 = vmul.f32 %v488, %v428
      %v529 = vmul.f32 %v491, %v428
      %v530 = vmul.f32 %v494, %v428
      %v531 = vmul.f32 %v497, %v428
      %v532 = vmul.f32 %v500, %v428
      %v533 = vmul.f32 %v503, %v428
      %v534 = vmul.f32 %v506, %v428
      %v535 = vmul.f32 %v509, %v428
      %v536 = vmul.f32 %v512, %v428
      %v537 = vmul.f32 %v515, %v428
      %v538 = vmul.f32 %v518, %v428
      %v539 = vmul.f32 %v521, %v428
      %v540 = vmul.f32 %v524, %v428
      %v541 = vadd.f32 %v525, 1e-06
      %v542 = vadd.f32 %v526, 1e-06
      %v543 = vadd.f32 %v527, 1e-06
      %v544 = vadd.f32 %v528, 1e-06
      %v545 = vadd.f32 %v529, 1e-06
      %v546 = vadd.f32 %v530, 1e-06
      %v547 = vadd.f32 %v531, 1e-06
      %v548 = vadd.f32 %v532, 1e-06
      %v549 = vadd.f32 %v533, 1e-06
      %v550 = vadd.f32 %v534, 1e-06
      %v551 = vadd.f32 %v535, 1e-06
      %v552 = vadd.f32 %v536, 1e-06
      %v553 = vadd.f32 %v537, 1e-06
      %v554 = vadd.f32 %v538, 1e-06
      %v555 = vadd.f32 %v539, 1e-06
      %v556 = vadd.f32 %v540, 1e-06
      %v557 = vrsqrt.pop %v541
      %v558 = vrsqrt.pop %v542
      %v559 = vrsqrt.pop %v543
      %v560 = vrsqrt.pop %v544
      %v561 = vrsqrt.pop %v545
      %v562 = vrsqrt.pop %v546
      %v563 = vrsqrt.pop %v547
      %v564 = vrsqrt.pop %v548
      %v565 = vrsqrt.pop %v549
      %v566 = vrsqrt.pop %v550
      %v567 = vrsqrt.pop %v551
      %v568 = vrsqrt.pop %v552
      %v569 = vrsqrt.pop %v553
      %v570 = vrsqrt.pop %v554
      %v571 = vrsqrt.pop %v555
      %v572 = vrsqrt.pop %v556
      %v573 = vmul.f32 %v445, %v557
      %v574 = vmul.f32 %v446, %v558
      %v575 = vmul.f32 %v447, %v559
      %v576 = vmul.f32 %v448, %v560
      %v577 = vmul.f32 %v449, %v561
      %v578 = vmul.f32 %v450, %v562
      %v579 = vmul.f32 %v451, %v563
      %v580 = vmul.f32 %v452, %v564
      %v581 = vmul.f32 %v453, %v565
      %v582 = vmul.f32 %v454, %v566
      %v583 = vmul.f32 %v455, %v567
      %v584 = vmul.f32 %v456, %v568
      %v585 = vmul.f32 %v457, %v569
      %v586 = vmul.f32 %v458, %v570
      %v587 = vmul.f32 %v459, %v571
      %v588 = vmul.f32 %v460, %v572
      %v589 = vlaneseq
      %v590 = vshrl.u32 %v589, 7
      %v591 = vsub.s32 0, %v590
      %v592 = vrot.slane %v377, %v591
      %v593 = vmul.f32 %v573, %v592
      %v594 = vmul.f32 %v574, %v592
      %v595 = vmul.f32 %v575, %v592
      %v596 = vmul.f32 %v576, %v592
      %v597 = vmul.f32 %v577, %v592
      %v598 = vmul.f32 %v578, %v592
      %v599 = vmul.f32 %v579, %v592
      %v600 = vmul.f32 %v580, %v592
      %v601 = vmul.f32 %v581, %v592
      %v602 = vmul.f32 %v582, %v592
      %v603 = vmul.f32 %v583, %v592
      %v604 = vmul.f32 %v584, %v592
      %v605 = vmul.f32 %v585, %v592
      %v606 = vmul.f32 %v586, %v592
      %v607 = vmul.f32 %v587, %v592
      %v608 = vmul.f32 %v588, %v592
      %v609 = vlaneseq
      %v610 = vshrl.u32 %v609, 7
      %v611 = vsub.s32 0, %v610
      %v612 = vrot.slane %v378, %v611
      %v613 = vadd.f32 %v593, %v612
      %v614 = vadd.f32 %v594, %v612
      %v615 = vadd.f32 %v595, %v612
      %v616 = vadd.f32 %v596, %v612
      %v617 = vadd.f32 %v597, %v612
      %v618 = vadd.f32 %v598, %v612
      %v619 = vadd.f32 %v599, %v612
      %v620 = vadd.f32 %v600, %v612
      %v621 = vadd.f32 %v601, %v612
      %v622 = vadd.f32 %v602, %v612
      %v623 = vadd.f32 %v603, %v612
      %v624 = vadd.f32 %v604, %v612
      %v625 = vadd.f32 %v605, %v612
      %v626 = vadd.f32 %v606, %v612
      %v627 = vadd.f32 %v607, %v612
      %v628 = vadd.f32 %v608, %v612
      %v629 = vld [vmem:[%s352] sm:$0xff]
      %v630 = vld [vmem:[%s352 + $0x8] sm:$0xff]
      %v631 = vld [vmem:[%s352 + $0x10] sm:$0xff]
      %v632 = vld [vmem:[%s352 + $0x18] sm:$0xff]
      %v633 = vld [vmem:[%s352 + $0x20] sm:$0xff]
      %v634 = vld [vmem:[%s352 + $0x28] sm:$0xff]
      %v635 = vld [vmem:[%s352 + $0x30] sm:$0xff]
      %v636 = vld [vmem:[%s352 + $0x38] sm:$0xff]
      %v637 = vld [vmem:[%s352 + $0x40] sm:$0xff]
      %v638 = vld [vmem:[%s352 + $0x48] sm:$0xff]
      %v639 = vld [vmem:[%s352 + $0x50] sm:$0xff]
      %v640 = vld [vmem:[%s352 + $0x58] sm:$0xff]
      %v641 = vld [vmem:[%s352 + $0x60] sm:$0xff]
      %v642 = vld [vmem:[%s352 + $0x68] sm:$0xff]
      %v643 = vld [vmem:[%s352 + $0x70] sm:$0xff]
      %v644 = vld [vmem:[%s352 + $0x78] sm:$0xff]
      %v645 = vld [vmem:[%s3] sm:$0x1]
      %v646 = vld [vmem:[%s3 + $0x1] sm:$0x1]
      %vm647 = vcmask 261120
      %v648 = vsel %vm647, %v629, 0.0
      %649 = vadd.xlane.f32.xlu0 %v648
      %v650 = vpop.xlane.xlu0 %649
      %v651 = vsel %vm647, %v630, 0.0
      %652 = vadd.xlane.f32.xlu0 %v651
      %v653 = vpop.xlane.xlu0 %652
      %v654 = vsel %vm647, %v631, 0.0
      %655 = vadd.xlane.f32.xlu0 %v654
      %v656 = vpop.xlane.xlu0 %655
      %v657 = vsel %vm647, %v632, 0.0
      %658 = vadd.xlane.f32.xlu0 %v657
      %v659 = vpop.xlane.xlu0 %658
      %v660 = vsel %vm647, %v633, 0.0
      %661 = vadd.xlane.f32.xlu0 %v660
      %v662 = vpop.xlane.xlu0 %661
      %v663 = vsel %vm647, %v634, 0.0
      %664 = vadd.xlane.f32.xlu0 %v663
      %v665 = vpop.xlane.xlu0 %664
      %v666 = vsel %vm647, %v635, 0.0
      %667 = vadd.xlane.f32.xlu0 %v666
      %v668 = vpop.xlane.xlu0 %667
      %v669 = vsel %vm647, %v636, 0.0
      %670 = vadd.xlane.f32.xlu0 %v669
      %v671 = vpop.xlane.xlu0 %670
      %v672 = vsel %vm647, %v637, 0.0
      %673 = vadd.xlane.f32.xlu0 %v672
      %v674 = vpop.xlane.xlu0 %673
      %v675 = vsel %vm647, %v638, 0.0
      %676 = vadd.xlane.f32.xlu0 %v675
      %v677 = vpop.xlane.xlu0 %676
      %v678 = vsel %vm647, %v639, 0.0
      %679 = vadd.xlane.f32.xlu0 %v678
      %v680 = vpop.xlane.xlu0 %679
      %v681 = vsel %vm647, %v640, 0.0
      %682 = vadd.xlane.f32.xlu0 %v681
      %v683 = vpop.xlane.xlu0 %682
      %v684 = vsel %vm647, %v641, 0.0
      %685 = vadd.xlane.f32.xlu0 %v684
      %v686 = vpop.xlane.xlu0 %685
      %v687 = vsel %vm647, %v642, 0.0
      %688 = vadd.xlane.f32.xlu0 %v687
      %v689 = vpop.xlane.xlu0 %688
      %v690 = vsel %vm647, %v643, 0.0
      %691 = vadd.xlane.f32.xlu0 %v690
      %v692 = vpop.xlane.xlu0 %691
      %v693 = vsel %vm647, %v644, 0.0
      %694 = vadd.xlane.f32.xlu0 %v693
      %v695 = vpop.xlane.xlu0 %694
      %v696 = vrcp.pop 32.0
      %v697 = vmul.f32 %v650, %v696
      %v698 = vmul.f32 %v653, %v696
      %v699 = vmul.f32 %v656, %v696
      %v700 = vmul.f32 %v659, %v696
      %v701 = vmul.f32 %v662, %v696
      %v702 = vmul.f32 %v665, %v696
      %v703 = vmul.f32 %v668, %v696
      %v704 = vmul.f32 %v671, %v696
      %v705 = vmul.f32 %v674, %v696
      %v706 = vmul.f32 %v677, %v696
      %v707 = vmul.f32 %v680, %v696
      %v708 = vmul.f32 %v683, %v696
      %v709 = vmul.f32 %v686, %v696
      %v710 = vmul.f32 %v689, %v696
      %v711 = vmul.f32 %v692, %v696
      %v712 = vmul.f32 %v695, %v696
      %v713 = vsub.f32 %v629, %v697
      %v714 = vsub.f32 %v630, %v698
      %v715 = vsub.f32 %v631, %v699
      %v716 = vsub.f32 %v632, %v700
      %v717 = vsub.f32 %v633, %v701
      %v718 = vsub.f32 %v634, %v702
      %v719 = vsub.f32 %v635, %v703
      %v720 = vsub.f32 %v636, %v704
      %v721 = vsub.f32 %v637, %v705
      %v722 = vsub.f32 %v638, %v706
      %v723 = vsub.f32 %v639, %v707
      %v724 = vsub.f32 %v640, %v708
      %v725 = vsub.f32 %v641, %v709
      %v726 = vsub.f32 %v642, %v710
      %v727 = vsub.f32 %v643, %v711
      %v728 = vsub.f32 %v644, %v712
      %v729 = vmul.f32 %v713, %v713
      %v730 = vmul.f32 %v714, %v714
      %v731 = vmul.f32 %v715, %v715
      %v732 = vmul.f32 %v716, %v716
      %v733 = vmul.f32 %v717, %v717
      %v734 = vmul.f32 %v718, %v718
      %v735 = vmul.f32 %v719, %v719
      %v736 = vmul.f32 %v720, %v720
      %v737 = vmul.f32 %v721, %v721
      %v738 = vmul.f32 %v722, %v722
      %v739 = vmul.f32 %v723, %v723
      %v740 = vmul.f32 %v724, %v724
      %v741 = vmul.f32 %v725, %v725
      %v742 = vmul.f32 %v726, %v726
      %v743 = vmul.f32 %v727, %v727
      %v744 = vmul.f32 %v728, %v728
      %v745 = vsel %vm647, %v729, 0.0
      %746 = vadd.xlane.f32.xlu0 %v745
      %v747 = vpop.xlane.xlu0 %746
      %v748 = vsel %vm647, %v730, 0.0
      %749 = vadd.xlane.f32.xlu0 %v748
      %v750 = vpop.xlane.xlu0 %749
      %v751 = vsel %vm647, %v731, 0.0
      %752 = vadd.xlane.f32.xlu0 %v751
      %v753 = vpop.xlane.xlu0 %752
      %v754 = vsel %vm647, %v732, 0.0
      %755 = vadd.xlane.f32.xlu0 %v754
      %v756 = vpop.xlane.xlu0 %755
      %v757 = vsel %vm647, %v733, 0.0
      %758 = vadd.xlane.f32.xlu0 %v757
      %v759 = vpop.xlane.xlu0 %758
      %v760 = vsel %vm647, %v734, 0.0
      %761 = vadd.xlane.f32.xlu0 %v760
      %v762 = vpop.xlane.xlu0 %761
      %v763 = vsel %vm647, %v735, 0.0
      %764 = vadd.xlane.f32.xlu0 %v763
      %v765 = vpop.xlane.xlu0 %764
      %v766 = vsel %vm647, %v736, 0.0
      %767 = vadd.xlane.f32.xlu0 %v766
      %v768 = vpop.xlane.xlu0 %767
      %v769 = vsel %vm647, %v737, 0.0
      %770 = vadd.xlane.f32.xlu0 %v769
      %v771 = vpop.xlane.xlu0 %770
      %v772 = vsel %vm647, %v738, 0.0
      %773 = vadd.xlane.f32.xlu0 %v772
      %v774 = vpop.xlane.xlu0 %773
      %v775 = vsel %vm647, %v739, 0.0
      %776 = vadd.xlane.f32.xlu0 %v775
      %v777 = vpop.xlane.xlu0 %776
      %v778 = vsel %vm647, %v740, 0.0
      %779 = vadd.xlane.f32.xlu0 %v778
      %v780 = vpop.xlane.xlu0 %779
      %v781 = vsel %vm647, %v741, 0.0
      %782 = vadd.xlane.f32.xlu0 %v781
      %v783 = vpop.xlane.xlu0 %782
      %v784 = vsel %vm647, %v742, 0.0
      %785 = vadd.xlane.f32.xlu0 %v784
      %v786 = vpop.xlane.xlu0 %785
      %v787 = vsel %vm647, %v743, 0.0
      %788 = vadd.xlane.f32.xlu0 %v787
      %v789 = vpop.xlane.xlu0 %788
      %v790 = vsel %vm647, %v744, 0.0
      %791 = vadd.xlane.f32.xlu0 %v790
      %v792 = vpop.xlane.xlu0 %791
      %v793 = vmul.f32 %v747, %v696
      %v794 = vmul.f32 %v750, %v696
      %v795 = vmul.f32 %v753, %v696
      %v796 = vmul.f32 %v756, %v696
      %v797 = vmul.f32 %v759, %v696
      %v798 = vmul.f32 %v762, %v696
      %v799 = vmul.f32 %v765, %v696
      %v800 = vmul.f32 %v768, %v696
      %v801 = vmul.f32 %v771, %v696
      %v802 = vmul.f32 %v774, %v696
      %v803 = vmul.f32 %v777, %v696
      %v804 = vmul.f32 %v780, %v696
      %v805 = vmul.f32 %v783, %v696
      %v806 = vmul.f32 %v786, %v696
      %v807 = vmul.f32 %v789, %v696
      %v808 = vmul.f32 %v792, %v696
      %v809 = vadd.f32 %v793, 1e-06
      %v810 = vadd.f32 %v794, 1e-06
      %v811 = vadd.f32 %v795, 1e-06
      %v812 = vadd.f32 %v796, 1e-06
      %v813 = vadd.f32 %v797, 1e-06
      %v814 = vadd.f32 %v798, 1e-06
      %v815 = vadd.f32 %v799, 1e-06
      %v816 = vadd.f32 %v800, 1e-06
      %v817 = vadd.f32 %v801, 1e-06
      %v818 = vadd.f32 %v802, 1e-06
      %v819 = vadd.f32 %v803, 1e-06
      %v820 = vadd.f32 %v804, 1e-06
      %v821 = vadd.f32 %v805, 1e-06
      %v822 = vadd.f32 %v806, 1e-06
      %v823 = vadd.f32 %v807, 1e-06
      %v824 = vadd.f32 %v808, 1e-06
      %v825 = vrsqrt.pop %v809
      %v826 = vrsqrt.pop %v810
      %v827 = vrsqrt.pop %v811
      %v828 = vrsqrt.pop %v812
      %v829 = vrsqrt.pop %v813
      %v830 = vrsqrt.pop %v814
      %v831 = vrsqrt.pop %v815
      %v832 = vrsqrt.pop %v816
      %v833 = vrsqrt.pop %v817
      %v834 = vrsqrt.pop %v818
      %v835 = vrsqrt.pop %v819
      %v836 = vrsqrt.pop %v820
      %v837 = vrsqrt.pop %v821
      %v838 = vrsqrt.pop %v822
      %v839 = vrsqrt.pop %v823
      %v840 = vrsqrt.pop %v824
      %v841 = vmul.f32 %v713, %v825
      %v842 = vmul.f32 %v714, %v826
      %v843 = vmul.f32 %v715, %v827
      %v844 = vmul.f32 %v716, %v828
      %v845 = vmul.f32 %v717, %v829
      %v846 = vmul.f32 %v718, %v830
      %v847 = vmul.f32 %v719, %v831
      %v848 = vmul.f32 %v720, %v832
      %v849 = vmul.f32 %v721, %v833
      %v850 = vmul.f32 %v722, %v834
      %v851 = vmul.f32 %v723, %v835
      %v852 = vmul.f32 %v724, %v836
      %v853 = vmul.f32 %v725, %v837
      %v854 = vmul.f32 %v726, %v838
      %v855 = vmul.f32 %v727, %v839
      %v856 = vmul.f32 %v728, %v840
      %v857 = vlaneseq
      %v858 = vshrl.u32 %v857, 7
      %v859 = vsub.s32 0, %v858
      %v860 = vrot.slane %v645, %v859
      %v861 = vmul.f32 %v841, %v860
      %v862 = vmul.f32 %v842, %v860
      %v863 = vmul.f32 %v843, %v860
      %v864 = vmul.f32 %v844, %v860
      %v865 = vmul.f32 %v845, %v860
      %v866 = vmul.f32 %v846, %v860
      %v867 = vmul.f32 %v847, %v860
      %v868 = vmul.f32 %v848, %v860
      %v869 = vmul.f32 %v849, %v860
      %v870 = vmul.f32 %v850, %v860
      %v871 = vmul.f32 %v851, %v860
      %v872 = vmul.f32 %v852, %v860
      %v873 = vmul.f32 %v853, %v860
      %v874 = vmul.f32 %v854, %v860
      %v875 = vmul.f32 %v855, %v860
      %v876 = vmul.f32 %v856, %v860
      %v877 = vlaneseq
      %v878 = vshrl.u32 %v877, 7
      %v879 = vsub.s32 0, %v878
      %v880 = vrot.slane %v646, %v879
      %v881 = vadd.f32 %v861, %v880
      %v882 = vadd.f32 %v862, %v880
      %v883 = vadd.f32 %v863, %v880
      %v884 = vadd.f32 %v864, %v880
      %v885 = vadd.f32 %v865, %v880
      %v886 = vadd.f32 %v866, %v880
      %v887 = vadd.f32 %v867, %v880
      %v888 = vadd.f32 %v868, %v880
      %v889 = vadd.f32 %v869, %v880
      %v890 = vadd.f32 %v870, %v880
      %v891 = vadd.f32 %v871, %v880
      %v892 = vadd.f32 %v872, %v880
      %v893 = vadd.f32 %v873, %v880
      %v894 = vadd.f32 %v874, %v880
      %v895 = vadd.f32 %v875, %v880
      %v896 = vadd.f32 %v876, %v880
      %v897 = vld [vmem:[%s4] sm:$0xf]
      %v898 = vld [vmem:[%s4 + $0x4] sm:$0xf]
      %v899 = vld [vmem:[%s4 + $0x8] sm:$0xf]
      %v900 = vld [vmem:[%s4 + $0xc] sm:$0xf]
      %v901 = vld [vmem:[%s4 + $0x10] sm:$0xf]
      %v902 = vld [vmem:[%s4 + $0x14] sm:$0xf]
      %v903 = vld [vmem:[%s4 + $0x18] sm:$0xf]
      %v904 = vld [vmem:[%s4 + $0x1c] sm:$0xf]
      %v905 = vpack.c.bf16 %v614, %v613
      %v906 = vpack.c.bf16 %v616, %v615
      %v907 = vpack.c.bf16 %v618, %v617
      %v908 = vpack.c.bf16 %v620, %v619
      %v909 = vpack.c.bf16 %v622, %v621
      %v910 = vpack.c.bf16 %v624, %v623
      %v911 = vpack.c.bf16 %v626, %v625
      %v912 = vpack.c.bf16 %v628, %v627
      %v913 = vld [vmem:[%s4 + $0x20] sm:$0xf]
      %v914 = vld [vmem:[%s4 + $0x24] sm:$0xf]
      %v915 = vld [vmem:[%s4 + $0x28] sm:$0xf]
      %v916 = vld [vmem:[%s4 + $0x2c] sm:$0xf]
      %v917 = vpack.c.bf16 %v882, %v881
      %v918 = vpack.c.bf16 %v884, %v883
      %v919 = vpack.c.bf16 %v886, %v885
      %v920 = vpack.c.bf16 %v888, %v887
      %v921 = vpack.c.bf16 %v890, %v889
      %v922 = vpack.c.bf16 %v892, %v891
      %v923 = vpack.c.bf16 %v894, %v893
      %v924 = vpack.c.bf16 %v896, %v895
      %v929 = vunpack.c.l.b16 %v913
      %v930 = vunpack.c.l.b16 %v914
      %v931 = vunpack.c.l.b16 %v915
      %v932 = vunpack.c.l.b16 %v916
      %v933 = vpack.c.b16 %v930, %v929
      %v934 = vpack.c.b16 %v932, %v931
      %v938 = vsel %vm647, %v917, 0
      %v941 = vsel %vm647, %v918, 0
      %v944 = vsel %vm647, %v919, 0
      %v947 = vsel %vm647, %v920, 0
      %v950 = vsel %vm647, %v921, 0
      %v953 = vsel %vm647, %v922, 0
      %v956 = vsel %vm647, %v923, 0
      %v959 = vsel %vm647, %v924, 0
      %961 = vmatprep.subr.bf16.mxu0 0
      %962 = vmatpush1.bf16.msra.mxu0 %v933
      %963 = vmatprep.subr.bf16.mxu0 0
      %964 = vmatpush1.bf16.msra.mxu0 %v934
      %965 = vmatprep.subr.bf16.mxu0 0
      %966 = vmatpush1.bf16.msra.mxu0 0
      %967 = vmatprep.subr.bf16.mxu0 0
      %968 = vmatpush1.bf16.msra.mxu0 0
      %969 = vmatprep.subr.bf16.mxu0 0
      %970 = vmatpush1.bf16.msra.mxu0 0
      %971 = vmatprep.subr.bf16.mxu0 0
      %972 = vmatpush1.bf16.msra.mxu0 0
      %973 = vmatprep.subr.bf16.mxu0 0
      %974 = vmatpush1.bf16.msra.mxu0 0
      %975 = vmatprep.subr.bf16.mxu0 0
      %976 = vmatpush1.bf16.msra.mxu0 0
      %977 = vmatprep.subr.bf16.mxu0 0
      %978 = vmatpush1.bf16.msra.mxu0 0
      %979 = vmatprep.subr.bf16.mxu0 0
      %980 = vmatpush1.bf16.msra.mxu0 0
      %981 = vmatprep.subr.bf16.mxu0 0
      %982 = vmatpush1.bf16.msra.mxu0 0
      %983 = vmatprep.subr.bf16.mxu0 0
      %984 = vmatpush1.bf16.msra.mxu0 0
      %985 = vmatprep.subr.bf16.mxu0 0
      %986 = vmatpush1.bf16.msra.mxu0 0
      %987 = vmatprep.subr.bf16.mxu0 0
      %988 = vmatpush1.bf16.msra.mxu0 0
      %989 = vmatprep.subr.bf16.mxu0 0
      %990 = vmatpush1.bf16.msra.mxu0 0
      %991 = vmatprep.subr.bf16.mxu0 0
      %992 = vmatpush1.bf16.msra.mxu0 0
      %993 = vmatprep.mubr.bf16.mxu0 0
      %994 = vmatmul.mubr.bf16.gmra.mrb[0].mxu0 %v938
      %v995 = vpop.f32.mrb[0].mxu0
      %v996 = vadd.f32 0.0, %v995
      %v997 = vpop.f32.mrb[0].mxu0
      %v998 = vpop.f32.mrb[0].mxu0
      %v999 = vadd.f32 0.0, %v998
      %v1000 = vpop.f32.mrb[0].mxu0
      %1001 = vmatprep.mubr.bf16.mxu0 0
      %1002 = vmatmul.mubr.bf16.gmra.mrb[0].mxu0 %v941
      %v1003 = vpop.f32.mrb[0].mxu0
      %v1004 = vadd.f32 0.0, %v1003
      %v1005 = vpop.f32.mrb[0].mxu0
      %v1006 = vpop.f32.mrb[0].mxu0
      %v1007 = vadd.f32 0.0, %v1006
      %v1008 = vpop.f32.mrb[0].mxu0
      %1009 = vmatprep.mubr.bf16.mxu0 0
      %1010 = vmatmul.mubr.bf16.gmra.mrb[0].mxu0 %v944
      %v1011 = vpop.f32.mrb[0].mxu0
      %v1012 = vadd.f32 0.0, %v1011
      %v1013 = vpop.f32.mrb[0].mxu0
      %v1014 = vpop.f32.mrb[0].mxu0
      %v1015 = vadd.f32 0.0, %v1014
      %v1016 = vpop.f32.mrb[0].mxu0
      %1017 = vmatprep.mubr.bf16.mxu0 0
      %1018 = vmatmul.mubr.bf16.gmra.mrb[0].mxu0 %v947
      %v1019 = vpop.f32.mrb[0].mxu0
      %v1020 = vadd.f32 0.0, %v1019
      %v1021 = vpop.f32.mrb[0].mxu0
      %v1022 = vpop.f32.mrb[0].mxu0
      %v1023 = vadd.f32 0.0, %v1022
      %v1024 = vpop.f32.mrb[0].mxu0
      %1025 = vmatprep.mubr.bf16.mxu0 0
      %1026 = vmatmul.mubr.bf16.gmra.mrb[0].mxu0 %v950
      %v1027 = vpop.f32.mrb[0].mxu0
      %v1028 = vadd.f32 0.0, %v1027
      %v1029 = vpop.f32.mrb[0].mxu0
      %v1030 = vpop.f32.mrb[0].mxu0
      %v1031 = vadd.f32 0.0, %v1030
      %v1032 = vpop.f32.mrb[0].mxu0
      %1033 = vmatprep.mubr.bf16.mxu0 0
      %1034 = vmatmul.mubr.bf16.gmra.mrb[0].mxu0 %v953
      %v1035 = vpop.f32.mrb[0].mxu0
      %v1036 = vadd.f32 0.0, %v1035
      %v1037 = vpop.f32.mrb[0].mxu0
      %v1038 = vpop.f32.mrb[0].mxu0
      %v1039 = vadd.f32 0.0, %v1038
      %v1040 = vpop.f32.mrb[0].mxu0
      %1041 = vmatprep.mubr.bf16.mxu0 0
      %1042 = vmatmul.mubr.bf16.gmra.mrb[0].mxu0 %v956
      %v1043 = vpop.f32.mrb[0].mxu0
      %v1044 = vadd.f32 0.0, %v1043
      %v1045 = vpop.f32.mrb[0].mxu0
      %v1046 = vpop.f32.mrb[0].mxu0
      %v1047 = vadd.f32 0.0, %v1046
      %v1048 = vpop.f32.mrb[0].mxu0
      %1049 = vmatprep.mubr.bf16.mxu0 0
      %1050 = vmatmul.mubr.bf16.gmra.mrb[0].mxu0 %v959
      %v1051 = vpop.f32.mrb[0].mxu0
      %v1052 = vadd.f32 0.0, %v1051
      %v1053 = vpop.f32.mrb[0].mxu0
      %v1054 = vpop.f32.mrb[0].mxu0
      %v1055 = vadd.f32 0.0, %v1054
      %v1056 = vpop.f32.mrb[0].mxu0
      %1057 = vdwg.mxu0
      %v1066 = vunpack.c.l.b16 %v897
      %v1067 = vunpack.c.l.b16 %v898
      %v1068 = vunpack.c.l.b16 %v899
      %v1069 = vunpack.c.l.b16 %v900
      %v1070 = vunpack.c.l.b16 %v901
      %v1071 = vunpack.c.l.b16 %v902
      %v1072 = vunpack.c.l.b16 %v903
      %v1073 = vunpack.c.l.b16 %v904
      %v1074 = vpack.c.b16 %v1067, %v1066
      %v1075 = vpack.c.b16 %v1069, %v1068
      %v1076 = vpack.c.b16 %v1071, %v1070
      %v1077 = vpack.c.b16 %v1073, %v1072
      %v1083 = vsel %vm379, %v905, 0
      %v1086 = vsel %vm379, %v906, 0
      %v1089 = vsel %vm379, %v907, 0
      %v1092 = vsel %vm379, %v908, 0
      %v1095 = vsel %vm379, %v909, 0
      %v1098 = vsel %vm379, %v910, 0
      %v1101 = vsel %vm379, %v911, 0
      %v1104 = vsel %vm379, %v912, 0
      %1106 = vmatprep.subr.bf16.mxu0 0
      %1107 = vmatpush1.bf16.msra.mxu0 %v1074
      %1108 = vmatprep.subr.bf16.mxu0 0
      %1109 = vmatpush1.bf16.msra.mxu0 %v1075
      %1110 = vmatprep.subr.bf16.mxu0 0
      %1111 = vmatpush1.bf16.msra.mxu0 %v1076
      %1112 = vmatprep.subr.bf16.mxu0 0
      %1113 = vmatpush1.bf16.msra.mxu0 %v1077
      %1114 = vmatprep.subr.bf16.mxu0 0
      %1115 = vmatpush1.bf16.msra.mxu0 0
      %1116 = vmatprep.subr.bf16.mxu0 0
      %1117 = vmatpush1.bf16.msra.mxu0 0
      %1118 = vmatprep.subr.bf16.mxu0 0
      %1119 = vmatpush1.bf16.msra.mxu0 0
      %1120 = vmatprep.subr.bf16.mxu0 0
      %1121 = vmatpush1.bf16.msra.mxu0 0
      %1122 = vmatprep.subr.bf16.mxu0 0
      %1123 = vmatpush1.bf16.msra.mxu0 0
      %1124 = vmatprep.subr.bf16.mxu0 0
      %1125 = vmatpush1.bf16.msra.mxu0 0
      %1126 = vmatprep.subr.bf16.mxu0 0
      %1127 = vmatpush1.bf16.msra.mxu0 0
      %1128 = vmatprep.subr.bf16.mxu0 0
      %1129 = vmatpush1.bf16.msra.mxu0 0
      %1130 = vmatprep.subr.bf16.mxu0 0
      %1131 = vmatpush1.bf16.msra.mxu0 0
      %1132 = vmatprep.subr.bf16.mxu0 0
      %1133 = vmatpush1.bf16.msra.mxu0 0
      %1134 = vmatprep.subr.bf16.mxu0 0
      %1135 = vmatpush1.bf16.msra.mxu0 0
      %1136 = vmatprep.subr.bf16.mxu0 0
      %1137 = vmatpush1.bf16.msra.mxu0 0
      %1138 = vmatprep.mubr.bf16.mxu0 0
      %1139 = vmatmul.mubr.bf16.gmra.mrb[0].mxu0 %v1083
      %v1140 = vpop.f32.mrb[0].mxu0
      %v1141 = vadd.f32 %v996, %v1140
      %v1142 = vpop.f32.mrb[0].mxu0
      %v1143 = vpop.f32.mrb[0].mxu0
      %v1144 = vadd.f32 %v999, %v1143
      %v1145 = vpop.f32.mrb[0].mxu0
      %1146 = vmatprep.mubr.bf16.mxu0 0
      %1147 = vmatmul.mubr.bf16.gmra.mrb[0].mxu0 %v1086
      %v1148 = vpop.f32.mrb[0].mxu0
      %v1149 = vadd.f32 %v1004, %v1148
      %v1150 = vpop.f32.mrb[0].mxu0
      %v1151 = vpop.f32.mrb[0].mxu0
      %v1152 = vadd.f32 %v1007, %v1151
      %v1153 = vpop.f32.mrb[0].mxu0
      %1154 = vmatprep.mubr.bf16.mxu0 0
      %1155 = vmatmul.mubr.bf16.gmra.mrb[0].mxu0 %v1089
      %v1156 = vpop.f32.mrb[0].mxu0
      %v1157 = vadd.f32 %v1012, %v1156
      %v1158 = vpop.f32.mrb[0].mxu0
      %v1159 = vpop.f32.mrb[0].mxu0
      %v1160 = vadd.f32 %v1015, %v1159
      %v1161 = vpop.f32.mrb[0].mxu0
      %1162 = vmatprep.mubr.bf16.mxu0 0
      %1163 = vmatmul.mubr.bf16.gmra.mrb[0].mxu0 %v1092
      %v1164 = vpop.f32.mrb[0].mxu0
      %v1165 = vadd.f32 %v1020, %v1164
      %v1166 = vpop.f32.mrb[0].mxu0
      %v1167 = vpop.f32.mrb[0].mxu0
      %v1168 = vadd.f32 %v1023, %v1167
      %v1169 = vpop.f32.mrb[0].mxu0
      %1170 = vmatprep.mubr.bf16.mxu0 0
      %1171 = vmatmul.mubr.bf16.gmra.mrb[0].mxu0 %v1095
      %v1172 = vpop.f32.mrb[0].mxu0
      %v1173 = vadd.f32 %v1028, %v1172
      %v1174 = vpop.f32.mrb[0].mxu0
      %v1175 = vpop.f32.mrb[0].mxu0
      %v1176 = vadd.f32 %v1031, %v1175
      %v1177 = vpop.f32.mrb[0].mxu0
      %1178 = vmatprep.mubr.bf16.mxu0 0
      %1179 = vmatmul.mubr.bf16.gmra.mrb[0].mxu0 %v1098
      %v1180 = vpop.f32.mrb[0].mxu0
      %v1181 = vadd.f32 %v1036, %v1180
      %v1182 = vpop.f32.mrb[0].mxu0
      %v1183 = vpop.f32.mrb[0].mxu0
      %v1184 = vadd.f32 %v1039, %v1183
      %v1185 = vpop.f32.mrb[0].mxu0
      %1186 = vmatprep.mubr.bf16.mxu0 0
      %1187 = vmatmul.mubr.bf16.gmra.mrb[0].mxu0 %v1101
      %v1188 = vpop.f32.mrb[0].mxu0
      %v1189 = vadd.f32 %v1044, %v1188
      %v1190 = vpop.f32.mrb[0].mxu0
      %v1191 = vpop.f32.mrb[0].mxu0
      %v1192 = vadd.f32 %v1047, %v1191
      %v1193 = vpop.f32.mrb[0].mxu0
      %1194 = vmatprep.mubr.bf16.mxu0 0
      %1195 = vmatmul.mubr.bf16.gmra.mrb[0].mxu0 %v1104
      %v1196 = vpop.f32.mrb[0].mxu0
      %v1197 = vadd.f32 %v1052, %v1196
      %v1198 = vpop.f32.mrb[0].mxu0
      %v1199 = vpop.f32.mrb[0].mxu0
      %v1200 = vadd.f32 %v1055, %v1199
      %v1201 = vpop.f32.mrb[0].mxu0
      %1202 = vdwg.mxu0
      %v1203 = vld [vmem:[%s5] sm:$0x1]
      %v1204 = vlaneseq
      %v1205 = vshrl.u32 %v1204, 7
      %v1206 = vsub.s32 0, %v1205
      %v1207 = vrot.slane %v1203, %v1206
      %v1208 = vadd.f32 %v1141, %v1207
      %v1209 = vadd.f32 %v1144, %v1207
      %v1210 = vadd.f32 %v1149, %v1207
      %v1211 = vadd.f32 %v1152, %v1207
      %v1212 = vadd.f32 %v1157, %v1207
      %v1213 = vadd.f32 %v1160, %v1207
      %v1214 = vadd.f32 %v1165, %v1207
      %v1215 = vadd.f32 %v1168, %v1207
      %v1216 = vadd.f32 %v1173, %v1207
      %v1217 = vadd.f32 %v1176, %v1207
      %v1218 = vadd.f32 %v1181, %v1207
      %v1219 = vadd.f32 %v1184, %v1207
      %v1220 = vadd.f32 %v1189, %v1207
      %v1221 = vadd.f32 %v1192, %v1207
      %v1222 = vadd.f32 %v1197, %v1207
      %v1223 = vadd.f32 %v1200, %v1207
      %vm1224 = vcmp.ge.f32.partialorder %v1208, 0.0
      %vm1225 = vcmp.ge.f32.partialorder %v1209, 0.0
      %vm1226 = vcmp.ge.f32.partialorder %v1210, 0.0
      %vm1227 = vcmp.ge.f32.partialorder %v1211, 0.0
      %vm1228 = vcmp.ge.f32.partialorder %v1212, 0.0
      %vm1229 = vcmp.ge.f32.partialorder %v1213, 0.0
      %vm1230 = vcmp.ge.f32.partialorder %v1214, 0.0
      %vm1231 = vcmp.ge.f32.partialorder %v1215, 0.0
      %vm1232 = vcmp.ge.f32.partialorder %v1216, 0.0
      %vm1233 = vcmp.ge.f32.partialorder %v1217, 0.0
      %vm1234 = vcmp.ge.f32.partialorder %v1218, 0.0
      %vm1235 = vcmp.ge.f32.partialorder %v1219, 0.0
      %vm1236 = vcmp.ge.f32.partialorder %v1220, 0.0
      %vm1237 = vcmp.ge.f32.partialorder %v1221, 0.0
      %vm1238 = vcmp.ge.f32.partialorder %v1222, 0.0
      %vm1239 = vcmp.ge.f32.partialorder %v1223, 0.0
      %v1240 = vmul.f32 %v1208, 0.01
      %v1241 = vmul.f32 %v1209, 0.01
      %v1242 = vmul.f32 %v1210, 0.01
      %v1243 = vmul.f32 %v1211, 0.01
      %v1244 = vmul.f32 %v1212, 0.01
      %v1245 = vmul.f32 %v1213, 0.01
      %v1246 = vmul.f32 %v1214, 0.01
      %v1247 = vmul.f32 %v1215, 0.01
      %v1248 = vmul.f32 %v1216, 0.01
      %v1249 = vmul.f32 %v1217, 0.01
      %v1250 = vmul.f32 %v1218, 0.01
      %v1251 = vmul.f32 %v1219, 0.01
      %v1252 = vmul.f32 %v1220, 0.01
      %v1253 = vmul.f32 %v1221, 0.01
      %v1254 = vmul.f32 %v1222, 0.01
      %v1255 = vmul.f32 %v1223, 0.01
      %v1256 = vsel %vm1224, %v1208, %v1240
      %v1257 = vsel %vm1225, %v1209, %v1241
      %v1258 = vsel %vm1226, %v1210, %v1242
      %v1259 = vsel %vm1227, %v1211, %v1243
      %v1260 = vsel %vm1228, %v1212, %v1244
      %v1261 = vsel %vm1229, %v1213, %v1245
      %v1262 = vsel %vm1230, %v1214, %v1246
      %v1263 = vsel %vm1231, %v1215, %v1247
      %v1264 = vsel %vm1232, %v1216, %v1248
      %v1265 = vsel %vm1233, %v1217, %v1249
      %v1266 = vsel %vm1234, %v1218, %v1250
      %v1267 = vsel %vm1235, %v1219, %v1251
      %v1268 = vsel %vm1236, %v1220, %v1252
      %v1269 = vsel %vm1237, %v1221, %v1253
      %v1270 = vsel %vm1238, %v1222, %v1254
      %v1271 = vsel %vm1239, %v1223, %v1255
      %v1272 = vlaneseq
      %v1273 = vand.u32 %v1272, 127
      %vm1274 = vcmp.lt.s32.totalorder %v1273, 32
      %v1275 = vmul.f32 %v1256, %v1256
      %v1276 = vmul.f32 %v1257, %v1257
      %v1277 = vmul.f32 %v1258, %v1258
      %v1278 = vmul.f32 %v1259, %v1259
      %v1279 = vmul.f32 %v1260, %v1260
      %v1280 = vmul.f32 %v1261, %v1261
      %v1281 = vmul.f32 %v1262, %v1262
      %v1282 = vmul.f32 %v1263, %v1263
      %v1283 = vmul.f32 %v1264, %v1264
      %v1284 = vmul.f32 %v1265, %v1265
      %v1285 = vmul.f32 %v1266, %v1266
      %v1286 = vmul.f32 %v1267, %v1267
      %v1287 = vmul.f32 %v1268, %v1268
      %v1288 = vmul.f32 %v1269, %v1269
      %v1289 = vmul.f32 %v1270, %v1270
      %v1290 = vmul.f32 %v1271, %v1271
      %v1291 = vsel %vm379, %v1275, 0.0
      %1292 = vadd.xlane.f32.xlu0 %v1291
      %v1293 = vpop.xlane.xlu0 %1292
      %v1294 = vsel %vm379, %v1276, 0.0
      %1295 = vadd.xlane.f32.xlu0 %v1294
      %v1296 = vpop.xlane.xlu0 %1295
      %v1297 = vsel %vm379, %v1277, 0.0
      %1298 = vadd.xlane.f32.xlu0 %v1297
      %v1299 = vpop.xlane.xlu0 %1298
      %v1300 = vsel %vm379, %v1278, 0.0
      %1301 = vadd.xlane.f32.xlu0 %v1300
      %v1302 = vpop.xlane.xlu0 %1301
      %v1303 = vsel %vm379, %v1279, 0.0
      %1304 = vadd.xlane.f32.xlu0 %v1303
      %v1305 = vpop.xlane.xlu0 %1304
      %v1306 = vsel %vm379, %v1280, 0.0
      %1307 = vadd.xlane.f32.xlu0 %v1306
      %v1308 = vpop.xlane.xlu0 %1307
      %v1309 = vsel %vm379, %v1281, 0.0
      %1310 = vadd.xlane.f32.xlu0 %v1309
      %v1311 = vpop.xlane.xlu0 %1310
      %v1312 = vsel %vm379, %v1282, 0.0
      %1313 = vadd.xlane.f32.xlu0 %v1312
      %v1314 = vpop.xlane.xlu0 %1313
      %v1315 = vsel %vm379, %v1283, 0.0
      %1316 = vadd.xlane.f32.xlu0 %v1315
      %v1317 = vpop.xlane.xlu0 %1316
      %v1318 = vsel %vm379, %v1284, 0.0
      %1319 = vadd.xlane.f32.xlu0 %v1318
      %v1320 = vpop.xlane.xlu0 %1319
      %v1321 = vsel %vm379, %v1285, 0.0
      %1322 = vadd.xlane.f32.xlu0 %v1321
      %v1323 = vpop.xlane.xlu0 %1322
      %v1324 = vsel %vm379, %v1286, 0.0
      %1325 = vadd.xlane.f32.xlu0 %v1324
      %v1326 = vpop.xlane.xlu0 %1325
      %v1327 = vsel %vm379, %v1287, 0.0
      %1328 = vadd.xlane.f32.xlu0 %v1327
      %v1329 = vpop.xlane.xlu0 %1328
      %v1330 = vsel %vm379, %v1288, 0.0
      %1331 = vadd.xlane.f32.xlu0 %v1330
      %v1332 = vpop.xlane.xlu0 %1331
      %v1333 = vsel %vm379, %v1289, 0.0
      %1334 = vadd.xlane.f32.xlu0 %v1333
      %v1335 = vpop.xlane.xlu0 %1334
      %v1336 = vsel %vm379, %v1290, 0.0
      %1337 = vadd.xlane.f32.xlu0 %v1336
      %v1338 = vpop.xlane.xlu0 %1337
      %v1339 = vsel %vm1274, %v1275, 0.0
      %v1340 = vsel %vm1274, %v1276, 0.0
      %v1341 = vsel %vm1274, %v1277, 0.0
      %v1342 = vsel %vm1274, %v1278, 0.0
      %v1343 = vsel %vm1274, %v1279, 0.0
      %v1344 = vsel %vm1274, %v1280, 0.0
      %v1345 = vsel %vm1274, %v1281, 0.0
      %v1346 = vsel %vm1274, %v1282, 0.0
      %v1347 = vsel %vm1274, %v1283, 0.0
      %v1348 = vsel %vm1274, %v1284, 0.0
      %v1349 = vsel %vm1274, %v1285, 0.0
      %v1350 = vsel %vm1274, %v1286, 0.0
      %v1351 = vsel %vm1274, %v1287, 0.0
      %v1352 = vsel %vm1274, %v1288, 0.0
      %v1353 = vsel %vm1274, %v1289, 0.0
      %v1354 = vsel %vm1274, %v1290, 0.0
      %v1355 = vsel %vm379, %v1339, 0.0
      %1356 = vadd.xlane.f32.xlu0 %v1355
      %v1357 = vpop.xlane.xlu0 %1356
      %v1358 = vsel %vm379, %v1340, 0.0
      %1359 = vadd.xlane.f32.xlu0 %v1358
      %v1360 = vpop.xlane.xlu0 %1359
      %v1361 = vsel %vm379, %v1341, 0.0
      %1362 = vadd.xlane.f32.xlu0 %v1361
      %v1363 = vpop.xlane.xlu0 %1362
      %v1364 = vsel %vm379, %v1342, 0.0
      %1365 = vadd.xlane.f32.xlu0 %v1364
      %v1366 = vpop.xlane.xlu0 %1365
      %v1367 = vsel %vm379, %v1343, 0.0
      %1368 = vadd.xlane.f32.xlu0 %v1367
      %v1369 = vpop.xlane.xlu0 %1368
      %v1370 = vsel %vm379, %v1344, 0.0
      %1371 = vadd.xlane.f32.xlu0 %v1370
      %v1372 = vpop.xlane.xlu0 %1371
      %v1373 = vsel %vm379, %v1345, 0.0
      %1374 = vadd.xlane.f32.xlu0 %v1373
      %v1375 = vpop.xlane.xlu0 %1374
      %v1376 = vsel %vm379, %v1346, 0.0
      %1377 = vadd.xlane.f32.xlu0 %v1376
      %v1378 = vpop.xlane.xlu0 %1377
      %v1379 = vsel %vm379, %v1347, 0.0
      %1380 = vadd.xlane.f32.xlu0 %v1379
      %v1381 = vpop.xlane.xlu0 %1380
      %v1382 = vsel %vm379, %v1348, 0.0
      %1383 = vadd.xlane.f32.xlu0 %v1382
      %v1384 = vpop.xlane.xlu0 %1383
      %v1385 = vsel %vm379, %v1349, 0.0
      %1386 = vadd.xlane.f32.xlu0 %v1385
      %v1387 = vpop.xlane.xlu0 %1386
      %v1388 = vsel %vm379, %v1350, 0.0
      %1389 = vadd.xlane.f32.xlu0 %v1388
      %v1390 = vpop.xlane.xlu0 %1389
      %v1391 = vsel %vm379, %v1351, 0.0
      %1392 = vadd.xlane.f32.xlu0 %v1391
      %v1393 = vpop.xlane.xlu0 %1392
      %v1394 = vsel %vm379, %v1352, 0.0
      %1395 = vadd.xlane.f32.xlu0 %v1394
      %v1396 = vpop.xlane.xlu0 %1395
      %v1397 = vsel %vm379, %v1353, 0.0
      %1398 = vadd.xlane.f32.xlu0 %v1397
      %v1399 = vpop.xlane.xlu0 %1398
      %v1400 = vsel %vm379, %v1354, 0.0
      %1401 = vadd.xlane.f32.xlu0 %v1400
      %v1402 = vpop.xlane.xlu0 %1401
      %v1403 = vsub.f32 %v1293, %v1357
      %v1404 = vsub.f32 %v1296, %v1360
      %v1405 = vsub.f32 %v1299, %v1363
      %v1406 = vsub.f32 %v1302, %v1366
      %v1407 = vsub.f32 %v1305, %v1369
      %v1408 = vsub.f32 %v1308, %v1372
      %v1409 = vsub.f32 %v1311, %v1375
      %v1410 = vsub.f32 %v1314, %v1378
      %v1411 = vsub.f32 %v1317, %v1381
      %v1412 = vsub.f32 %v1320, %v1384
      %v1413 = vsub.f32 %v1323, %v1387
      %v1414 = vsub.f32 %v1326, %v1390
      %v1415 = vsub.f32 %v1329, %v1393
      %v1416 = vsub.f32 %v1332, %v1396
      %v1417 = vsub.f32 %v1335, %v1399
      %v1418 = vsub.f32 %v1338, %v1402
      %v1419 = vmax.f32 %v1357, 1e-24
      %v1420 = vmax.f32 %v1360, 1e-24
      %v1421 = vmax.f32 %v1363, 1e-24
      %v1422 = vmax.f32 %v1366, 1e-24
      %v1423 = vmax.f32 %v1369, 1e-24
      %v1424 = vmax.f32 %v1372, 1e-24
      %v1425 = vmax.f32 %v1375, 1e-24
      %v1426 = vmax.f32 %v1378, 1e-24
      %v1427 = vmax.f32 %v1381, 1e-24
      %v1428 = vmax.f32 %v1384, 1e-24
      %v1429 = vmax.f32 %v1387, 1e-24
      %v1430 = vmax.f32 %v1390, 1e-24
      %v1431 = vmax.f32 %v1393, 1e-24
      %v1432 = vmax.f32 %v1396, 1e-24
      %v1433 = vmax.f32 %v1399, 1e-24
      %v1434 = vmax.f32 %v1402, 1e-24
      %v1435 = vrsqrt.pop %v1419
      %v1436 = vrsqrt.pop %v1420
      %v1437 = vrsqrt.pop %v1421
      %v1438 = vrsqrt.pop %v1422
      %v1439 = vrsqrt.pop %v1423
      %v1440 = vrsqrt.pop %v1424
      %v1441 = vrsqrt.pop %v1425
      %v1442 = vrsqrt.pop %v1426
      %v1443 = vrsqrt.pop %v1427
      %v1444 = vrsqrt.pop %v1428
      %v1445 = vrsqrt.pop %v1429
      %v1446 = vrsqrt.pop %v1430
      %v1447 = vrsqrt.pop %v1431
      %v1448 = vrsqrt.pop %v1432
      %v1449 = vrsqrt.pop %v1433
      %v1450 = vrsqrt.pop %v1434
      %v1451 = vmax.f32 %v1403, 1e-24
      %v1452 = vmax.f32 %v1404, 1e-24
      %v1453 = vmax.f32 %v1405, 1e-24
      %v1454 = vmax.f32 %v1406, 1e-24
      %v1455 = vmax.f32 %v1407, 1e-24
      %v1456 = vmax.f32 %v1408, 1e-24
      %v1457 = vmax.f32 %v1409, 1e-24
      %v1458 = vmax.f32 %v1410, 1e-24
      %v1459 = vmax.f32 %v1411, 1e-24
      %v1460 = vmax.f32 %v1412, 1e-24
      %v1461 = vmax.f32 %v1413, 1e-24
      %v1462 = vmax.f32 %v1414, 1e-24
      %v1463 = vmax.f32 %v1415, 1e-24
      %v1464 = vmax.f32 %v1416, 1e-24
      %v1465 = vmax.f32 %v1417, 1e-24
      %v1466 = vmax.f32 %v1418, 1e-24
      %v1467 = vrsqrt.pop %v1451
      %v1468 = vrsqrt.pop %v1452
      %v1469 = vrsqrt.pop %v1453
      %v1470 = vrsqrt.pop %v1454
      %v1471 = vrsqrt.pop %v1455
      %v1472 = vrsqrt.pop %v1456
      %v1473 = vrsqrt.pop %v1457
      %v1474 = vrsqrt.pop %v1458
      %v1475 = vrsqrt.pop %v1459
      %v1476 = vrsqrt.pop %v1460
      %v1477 = vrsqrt.pop %v1461
      %v1478 = vrsqrt.pop %v1462
      %v1479 = vrsqrt.pop %v1463
      %v1480 = vrsqrt.pop %v1464
      %v1481 = vrsqrt.pop %v1465
      %v1482 = vrsqrt.pop %v1466
      %v1483 = vsel %vm1274, %v1435, %v1467
      %v1484 = vsel %vm1274, %v1436, %v1468
      %v1485 = vsel %vm1274, %v1437, %v1469
      %v1486 = vsel %vm1274, %v1438, %v1470
      %v1487 = vsel %vm1274, %v1439, %v1471
      %v1488 = vsel %vm1274, %v1440, %v1472
      %v1489 = vsel %vm1274, %v1441, %v1473
      %v1490 = vsel %vm1274, %v1442, %v1474
      %v1491 = vsel %vm1274, %v1443, %v1475
      %v1492 = vsel %vm1274, %v1444, %v1476
      %v1493 = vsel %vm1274, %v1445, %v1477
      %v1494 = vsel %vm1274, %v1446, %v1478
      %v1495 = vsel %vm1274, %v1447, %v1479
      %v1496 = vsel %vm1274, %v1448, %v1480
      %v1497 = vsel %vm1274, %v1449, %v1481
      %v1498 = vsel %vm1274, %v1450, %v1482
      %v1499 = vmul.f32 %v1256, %v1483
      %v1500 = vmul.f32 %v1257, %v1484
      %v1501 = vmul.f32 %v1258, %v1485
      %v1502 = vmul.f32 %v1259, %v1486
      %v1503 = vmul.f32 %v1260, %v1487
      %v1504 = vmul.f32 %v1261, %v1488
      %v1505 = vmul.f32 %v1262, %v1489
      %v1506 = vmul.f32 %v1263, %v1490
      %v1507 = vmul.f32 %v1264, %v1491
      %v1508 = vmul.f32 %v1265, %v1492
      %v1509 = vmul.f32 %v1266, %v1493
      %v1510 = vmul.f32 %v1267, %v1494
      %v1511 = vmul.f32 %v1268, %v1495
      %v1512 = vmul.f32 %v1269, %v1496
      %v1513 = vmul.f32 %v1270, %v1497
      %v1514 = vmul.f32 %v1271, %v1498
      %v1515 = vld [vmem:[%s5 + $0x1] sm:$0x1]
      %v1516 = vld [vmem:[%s5 + $0x2] sm:$0x1]
      %v1517 = vsel %vm379, %v1499, 0.0
      %1518 = vadd.xlane.f32.xlu0 %v1517
      %v1519 = vpop.xlane.xlu0 %1518
      %v1520 = vsel %vm379, %v1500, 0.0
      %1521 = vadd.xlane.f32.xlu0 %v1520
      %v1522 = vpop.xlane.xlu0 %1521
      %v1523 = vsel %vm379, %v1501, 0.0
      %1524 = vadd.xlane.f32.xlu0 %v1523
      %v1525 = vpop.xlane.xlu0 %1524
      %v1526 = vsel %vm379, %v1502, 0.0
      %1527 = vadd.xlane.f32.xlu0 %v1526
      %v1528 = vpop.xlane.xlu0 %1527
      %v1529 = vsel %vm379, %v1503, 0.0
      %1530 = vadd.xlane.f32.xlu0 %v1529
      %v1531 = vpop.xlane.xlu0 %1530
      %v1532 = vsel %vm379, %v1504, 0.0
      %1533 = vadd.xlane.f32.xlu0 %v1532
      %v1534 = vpop.xlane.xlu0 %1533
      %v1535 = vsel %vm379, %v1505, 0.0
      %1536 = vadd.xlane.f32.xlu0 %v1535
      %v1537 = vpop.xlane.xlu0 %1536
      %v1538 = vsel %vm379, %v1506, 0.0
      %1539 = vadd.xlane.f32.xlu0 %v1538
      %v1540 = vpop.xlane.xlu0 %1539
      %v1541 = vsel %vm379, %v1507, 0.0
      %1542 = vadd.xlane.f32.xlu0 %v1541
      %v1543 = vpop.xlane.xlu0 %1542
      %v1544 = vsel %vm379, %v1508, 0.0
      %1545 = vadd.xlane.f32.xlu0 %v1544
      %v1546 = vpop.xlane.xlu0 %1545
      %v1547 = vsel %vm379, %v1509, 0.0
      %1548 = vadd.xlane.f32.xlu0 %v1547
      %v1549 = vpop.xlane.xlu0 %1548
      %v1550 = vsel %vm379, %v1510, 0.0
      %1551 = vadd.xlane.f32.xlu0 %v1550
      %v1552 = vpop.xlane.xlu0 %1551
      %v1553 = vsel %vm379, %v1511, 0.0
      %1554 = vadd.xlane.f32.xlu0 %v1553
      %v1555 = vpop.xlane.xlu0 %1554
      %v1556 = vsel %vm379, %v1512, 0.0
      %1557 = vadd.xlane.f32.xlu0 %v1556
      %v1558 = vpop.xlane.xlu0 %1557
      %v1559 = vsel %vm379, %v1513, 0.0
      %1560 = vadd.xlane.f32.xlu0 %v1559
      %v1561 = vpop.xlane.xlu0 %1560
      %v1562 = vsel %vm379, %v1514, 0.0
      %1563 = vadd.xlane.f32.xlu0 %v1562
      %v1564 = vpop.xlane.xlu0 %1563
      %v1565 = vmul.f32 %v1519, %v428
      %v1566 = vmul.f32 %v1522, %v428
      %v1567 = vmul.f32 %v1525, %v428
      %v1568 = vmul.f32 %v1528, %v428
      %v1569 = vmul.f32 %v1531, %v428
      %v1570 = vmul.f32 %v1534, %v428
      %v1571 = vmul.f32 %v1537, %v428
      %v1572 = vmul.f32 %v1540, %v428
      %v1573 = vmul.f32 %v1543, %v428
      %v1574 = vmul.f32 %v1546, %v428
      %v1575 = vmul.f32 %v1549, %v428
      %v1576 = vmul.f32 %v1552, %v428
      %v1577 = vmul.f32 %v1555, %v428
      %v1578 = vmul.f32 %v1558, %v428
      %v1579 = vmul.f32 %v1561, %v428
      %v1580 = vmul.f32 %v1564, %v428
      %v1581 = vsub.f32 %v1499, %v1565
      %v1582 = vsub.f32 %v1500, %v1566
      %v1583 = vsub.f32 %v1501, %v1567
      %v1584 = vsub.f32 %v1502, %v1568
      %v1585 = vsub.f32 %v1503, %v1569
      %v1586 = vsub.f32 %v1504, %v1570
      %v1587 = vsub.f32 %v1505, %v1571
      %v1588 = vsub.f32 %v1506, %v1572
      %v1589 = vsub.f32 %v1507, %v1573
      %v1590 = vsub.f32 %v1508, %v1574
      %v1591 = vsub.f32 %v1509, %v1575
      %v1592 = vsub.f32 %v1510, %v1576
      %v1593 = vsub.f32 %v1511, %v1577
      %v1594 = vsub.f32 %v1512, %v1578
      %v1595 = vsub.f32 %v1513, %v1579
      %v1596 = vsub.f32 %v1514, %v1580
      %v1597 = vmul.f32 %v1581, %v1581
      %v1598 = vmul.f32 %v1582, %v1582
      %v1599 = vmul.f32 %v1583, %v1583
      %v1600 = vmul.f32 %v1584, %v1584
      %v1601 = vmul.f32 %v1585, %v1585
      %v1602 = vmul.f32 %v1586, %v1586
      %v1603 = vmul.f32 %v1587, %v1587
      %v1604 = vmul.f32 %v1588, %v1588
      %v1605 = vmul.f32 %v1589, %v1589
      %v1606 = vmul.f32 %v1590, %v1590
      %v1607 = vmul.f32 %v1591, %v1591
      %v1608 = vmul.f32 %v1592, %v1592
      %v1609 = vmul.f32 %v1593, %v1593
      %v1610 = vmul.f32 %v1594, %v1594
      %v1611 = vmul.f32 %v1595, %v1595
      %v1612 = vmul.f32 %v1596, %v1596
      %v1613 = vsel %vm379, %v1597, 0.0
      %1614 = vadd.xlane.f32.xlu0 %v1613
      %v1615 = vpop.xlane.xlu0 %1614
      %v1616 = vsel %vm379, %v1598, 0.0
      %1617 = vadd.xlane.f32.xlu0 %v1616
      %v1618 = vpop.xlane.xlu0 %1617
      %v1619 = vsel %vm379, %v1599, 0.0
      %1620 = vadd.xlane.f32.xlu0 %v1619
      %v1621 = vpop.xlane.xlu0 %1620
      %v1622 = vsel %vm379, %v1600, 0.0
      %1623 = vadd.xlane.f32.xlu0 %v1622
      %v1624 = vpop.xlane.xlu0 %1623
      %v1625 = vsel %vm379, %v1601, 0.0
      %1626 = vadd.xlane.f32.xlu0 %v1625
      %v1627 = vpop.xlane.xlu0 %1626
      %v1628 = vsel %vm379, %v1602, 0.0
      %1629 = vadd.xlane.f32.xlu0 %v1628
      %v1630 = vpop.xlane.xlu0 %1629
      %v1631 = vsel %vm379, %v1603, 0.0
      %1632 = vadd.xlane.f32.xlu0 %v1631
      %v1633 = vpop.xlane.xlu0 %1632
      %v1634 = vsel %vm379, %v1604, 0.0
      %1635 = vadd.xlane.f32.xlu0 %v1634
      %v1636 = vpop.xlane.xlu0 %1635
      %v1637 = vsel %vm379, %v1605, 0.0
      %1638 = vadd.xlane.f32.xlu0 %v1637
      %v1639 = vpop.xlane.xlu0 %1638
      %v1640 = vsel %vm379, %v1606, 0.0
      %1641 = vadd.xlane.f32.xlu0 %v1640
      %v1642 = vpop.xlane.xlu0 %1641
      %v1643 = vsel %vm379, %v1607, 0.0
      %1644 = vadd.xlane.f32.xlu0 %v1643
      %v1645 = vpop.xlane.xlu0 %1644
      %v1646 = vsel %vm379, %v1608, 0.0
      %1647 = vadd.xlane.f32.xlu0 %v1646
      %v1648 = vpop.xlane.xlu0 %1647
      %v1649 = vsel %vm379, %v1609, 0.0
      %1650 = vadd.xlane.f32.xlu0 %v1649
      %v1651 = vpop.xlane.xlu0 %1650
      %v1652 = vsel %vm379, %v1610, 0.0
      %1653 = vadd.xlane.f32.xlu0 %v1652
      %v1654 = vpop.xlane.xlu0 %1653
      %v1655 = vsel %vm379, %v1611, 0.0
      %1656 = vadd.xlane.f32.xlu0 %v1655
      %v1657 = vpop.xlane.xlu0 %1656
      %v1658 = vsel %vm379, %v1612, 0.0
      %1659 = vadd.xlane.f32.xlu0 %v1658
      %v1660 = vpop.xlane.xlu0 %1659
      %v1661 = vmul.f32 %v1615, %v428
      %v1662 = vmul.f32 %v1618, %v428
      %v1663 = vmul.f32 %v1621, %v428
      %v1664 = vmul.f32 %v1624, %v428
      %v1665 = vmul.f32 %v1627, %v428
      %v1666 = vmul.f32 %v1630, %v428
      %v1667 = vmul.f32 %v1633, %v428
      %v1668 = vmul.f32 %v1636, %v428
      %v1669 = vmul.f32 %v1639, %v428
      %v1670 = vmul.f32 %v1642, %v428
      %v1671 = vmul.f32 %v1645, %v428
      %v1672 = vmul.f32 %v1648, %v428
      %v1673 = vmul.f32 %v1651, %v428
      %v1674 = vmul.f32 %v1654, %v428
      %v1675 = vmul.f32 %v1657, %v428
      %v1676 = vmul.f32 %v1660, %v428
      %v1677 = vadd.f32 %v1661, 1e-06
      %v1678 = vadd.f32 %v1662, 1e-06
      %v1679 = vadd.f32 %v1663, 1e-06
      %v1680 = vadd.f32 %v1664, 1e-06
      %v1681 = vadd.f32 %v1665, 1e-06
      %v1682 = vadd.f32 %v1666, 1e-06
      %v1683 = vadd.f32 %v1667, 1e-06
      %v1684 = vadd.f32 %v1668, 1e-06
      %v1685 = vadd.f32 %v1669, 1e-06
      %v1686 = vadd.f32 %v1670, 1e-06
      %v1687 = vadd.f32 %v1671, 1e-06
      %v1688 = vadd.f32 %v1672, 1e-06
      %v1689 = vadd.f32 %v1673, 1e-06
      %v1690 = vadd.f32 %v1674, 1e-06
      %v1691 = vadd.f32 %v1675, 1e-06
      %v1692 = vadd.f32 %v1676, 1e-06
      %v1693 = vrsqrt.pop %v1677
      %v1694 = vrsqrt.pop %v1678
      %v1695 = vrsqrt.pop %v1679
      %v1696 = vrsqrt.pop %v1680
      %v1697 = vrsqrt.pop %v1681
      %v1698 = vrsqrt.pop %v1682
      %v1699 = vrsqrt.pop %v1683
      %v1700 = vrsqrt.pop %v1684
      %v1701 = vrsqrt.pop %v1685
      %v1702 = vrsqrt.pop %v1686
      %v1703 = vrsqrt.pop %v1687
      %v1704 = vrsqrt.pop %v1688
      %v1705 = vrsqrt.pop %v1689
      %v1706 = vrsqrt.pop %v1690
      %v1707 = vrsqrt.pop %v1691
      %v1708 = vrsqrt.pop %v1692
      %v1709 = vmul.f32 %v1581, %v1693
      %v1710 = vmul.f32 %v1582, %v1694
      %v1711 = vmul.f32 %v1583, %v1695
      %v1712 = vmul.f32 %v1584, %v1696
      %v1713 = vmul.f32 %v1585, %v1697
      %v1714 = vmul.f32 %v1586, %v1698
      %v1715 = vmul.f32 %v1587, %v1699
      %v1716 = vmul.f32 %v1588, %v1700
      %v1717 = vmul.f32 %v1589, %v1701
      %v1718 = vmul.f32 %v1590, %v1702
      %v1719 = vmul.f32 %v1591, %v1703
      %v1720 = vmul.f32 %v1592, %v1704
      %v1721 = vmul.f32 %v1593, %v1705
      %v1722 = vmul.f32 %v1594, %v1706
      %v1723 = vmul.f32 %v1595, %v1707
      %v1724 = vmul.f32 %v1596, %v1708
      %v1725 = vlaneseq
      %v1726 = vshrl.u32 %v1725, 7
      %v1727 = vsub.s32 0, %v1726
      %v1728 = vrot.slane %v1515, %v1727
      %v1729 = vmul.f32 %v1709, %v1728
      %v1730 = vmul.f32 %v1710, %v1728
      %v1731 = vmul.f32 %v1711, %v1728
      %v1732 = vmul.f32 %v1712, %v1728
      %v1733 = vmul.f32 %v1713, %v1728
      %v1734 = vmul.f32 %v1714, %v1728
      %v1735 = vmul.f32 %v1715, %v1728
      %v1736 = vmul.f32 %v1716, %v1728
      %v1737 = vmul.f32 %v1717, %v1728
      %v1738 = vmul.f32 %v1718, %v1728
      %v1739 = vmul.f32 %v1719, %v1728
      %v1740 = vmul.f32 %v1720, %v1728
      %v1741 = vmul.f32 %v1721, %v1728
      %v1742 = vmul.f32 %v1722, %v1728
      %v1743 = vmul.f32 %v1723, %v1728
      %v1744 = vmul.f32 %v1724, %v1728
      %v1745 = vlaneseq
      %v1746 = vshrl.u32 %v1745, 7
      %v1747 = vsub.s32 0, %v1746
      %v1748 = vrot.slane %v1516, %v1747
      %v1749 = vadd.f32 %v1729, %v1748
      %v1750 = vadd.f32 %v1730, %v1748
      %v1751 = vadd.f32 %v1731, %v1748
      %v1752 = vadd.f32 %v1732, %v1748
      %v1753 = vadd.f32 %v1733, %v1748
      %v1754 = vadd.f32 %v1734, %v1748
      %v1755 = vadd.f32 %v1735, %v1748
      %v1756 = vadd.f32 %v1736, %v1748
      %v1757 = vadd.f32 %v1737, %v1748
      %v1758 = vadd.f32 %v1738, %v1748
      %v1759 = vadd.f32 %v1739, %v1748
      %v1760 = vadd.f32 %v1740, %v1748
      %v1761 = vadd.f32 %v1741, %v1748
      %v1762 = vadd.f32 %v1742, %v1748
      %v1763 = vadd.f32 %v1743, %v1748
      %v1764 = vadd.f32 %v1744, %v1748
      %v1765 = vld [vmem:[%s6] sm:$0xf]
      %v1766 = vld [vmem:[%s6 + $0x4] sm:$0xf]
      %v1767 = vld [vmem:[%s6 + $0x8] sm:$0xf]
      %v1768 = vld [vmem:[%s6 + $0xc] sm:$0xf]
      %v1769 = vld [vmem:[%s6 + $0x10] sm:$0xf]
      %v1770 = vld [vmem:[%s6 + $0x14] sm:$0xf]
      %v1771 = vld [vmem:[%s6 + $0x18] sm:$0xf]
      %v1772 = vld [vmem:[%s6 + $0x1c] sm:$0xf]
      %v1773 = vpack.c.bf16 %v1750, %v1749
      %v1774 = vpack.c.bf16 %v1752, %v1751
      %v1775 = vpack.c.bf16 %v1754, %v1753
      %v1776 = vpack.c.bf16 %v1756, %v1755
      %v1777 = vpack.c.bf16 %v1758, %v1757
      %v1778 = vpack.c.bf16 %v1760, %v1759
      %v1779 = vpack.c.bf16 %v1762, %v1761
      %v1780 = vpack.c.bf16 %v1764, %v1763
      %v1781 = vld [vmem:[%s7] sm:$0x1]
      %v1782 = vlaneseq
      %v1783 = vshrl.u32 %v1782, 7
      %v1784 = vsub.s32 0, %v1783
      %v1785 = vrot.slane %v1781, %v1784
      %v1794 = vunpack.c.l.b16 %v1765
      %v1795 = vunpack.c.l.b16 %v1766
      %v1796 = vunpack.c.l.b16 %v1767
      %v1797 = vunpack.c.l.b16 %v1768
      %v1798 = vunpack.c.l.b16 %v1769
      %v1799 = vunpack.c.l.b16 %v1770
      %v1800 = vunpack.c.l.b16 %v1771
      %v1801 = vunpack.c.l.b16 %v1772
      %v1802 = vpack.c.b16 %v1795, %v1794
      %v1803 = vpack.c.b16 %v1797, %v1796
      %v1804 = vpack.c.b16 %v1799, %v1798
      %v1805 = vpack.c.b16 %v1801, %v1800
      %v1811 = vsel %vm379, %v1773, 0
      %v1814 = vsel %vm379, %v1774, 0
      %v1817 = vsel %vm379, %v1775, 0
      %v1820 = vsel %vm379, %v1776, 0
      %v1823 = vsel %vm379, %v1777, 0
      %v1826 = vsel %vm379, %v1778, 0
      %v1829 = vsel %vm379, %v1779, 0
      %v1832 = vsel %vm379, %v1780, 0
      %1834 = vmatprep.subr.bf16.mxu0 0
      %1835 = vmatpush1.bf16.msra.mxu0 %v1802
      %1836 = vmatprep.subr.bf16.mxu0 0
      %1837 = vmatpush1.bf16.msra.mxu0 %v1803
      %1838 = vmatprep.subr.bf16.mxu0 0
      %1839 = vmatpush1.bf16.msra.mxu0 %v1804
      %1840 = vmatprep.subr.bf16.mxu0 0
      %1841 = vmatpush1.bf16.msra.mxu0 %v1805
      %1842 = vmatprep.subr.bf16.mxu0 0
      %1843 = vmatpush1.bf16.msra.mxu0 0
      %1844 = vmatprep.subr.bf16.mxu0 0
      %1845 = vmatpush1.bf16.msra.mxu0 0
      %1846 = vmatprep.subr.bf16.mxu0 0
      %1847 = vmatpush1.bf16.msra.mxu0 0
      %1848 = vmatprep.subr.bf16.mxu0 0
      %1849 = vmatpush1.bf16.msra.mxu0 0
      %1850 = vmatprep.subr.bf16.mxu0 0
      %1851 = vmatpush1.bf16.msra.mxu0 0
      %1852 = vmatprep.subr.bf16.mxu0 0
      %1853 = vmatpush1.bf16.msra.mxu0 0
      %1854 = vmatprep.subr.bf16.mxu0 0
      %1855 = vmatpush1.bf16.msra.mxu0 0
      %1856 = vmatprep.subr.bf16.mxu0 0
      %1857 = vmatpush1.bf16.msra.mxu0 0
      %1858 = vmatprep.subr.bf16.mxu0 0
      %1859 = vmatpush1.bf16.msra.mxu0 0
      %1860 = vmatprep.subr.bf16.mxu0 0
      %1861 = vmatpush1.bf16.msra.mxu0 0
      %1862 = vmatprep.subr.bf16.mxu0 0
      %1863 = vmatpush1.bf16.msra.mxu0 0
      %1864 = vmatprep.subr.bf16.mxu0 0
      %1865 = vmatpush1.bf16.msra.mxu0 0
      %1866 = vmatprep.mubr.bf16.mxu0 0
      %1867 = vmatmul.mubr.bf16.gmra.mrb[0].mxu0 %v1811
      %v1868 = vpop.f32.mrb[0].mxu0
      %v1869 = vadd.f32 %v1785, %v1868
      %v1870 = vpop.f32.mrb[0].mxu0
      %v1871 = vpop.f32.mrb[0].mxu0
      %v1872 = vadd.f32 %v1785, %v1871
      %v1873 = vpop.f32.mrb[0].mxu0
      %1874 = vmatprep.mubr.bf16.mxu0 0
      %1875 = vmatmul.mubr.bf16.gmra.mrb[0].mxu0 %v1814
      %v1876 = vpop.f32.mrb[0].mxu0
      %v1877 = vadd.f32 %v1785, %v1876
      %v1878 = vpop.f32.mrb[0].mxu0
      %v1879 = vpop.f32.mrb[0].mxu0
      %v1880 = vadd.f32 %v1785, %v1879
      %v1881 = vpop.f32.mrb[0].mxu0
      %1882 = vmatprep.mubr.bf16.mxu0 0
      %1883 = vmatmul.mubr.bf16.gmra.mrb[0].mxu0 %v1817
      %v1884 = vpop.f32.mrb[0].mxu0
      %v1885 = vadd.f32 %v1785, %v1884
      %v1886 = vpop.f32.mrb[0].mxu0
      %v1887 = vpop.f32.mrb[0].mxu0
      %v1888 = vadd.f32 %v1785, %v1887
      %v1889 = vpop.f32.mrb[0].mxu0
      %1890 = vmatprep.mubr.bf16.mxu0 0
      %1891 = vmatmul.mubr.bf16.gmra.mrb[0].mxu0 %v1820
      %v1892 = vpop.f32.mrb[0].mxu0
      %v1893 = vadd.f32 %v1785, %v1892
      %v1894 = vpop.f32.mrb[0].mxu0
      %v1895 = vpop.f32.mrb[0].mxu0
      %v1896 = vadd.f32 %v1785, %v1895
      %v1897 = vpop.f32.mrb[0].mxu0
      %1898 = vmatprep.mubr.bf16.mxu0 0
      %1899 = vmatmul.mubr.bf16.gmra.mrb[0].mxu0 %v1823
      %v1900 = vpop.f32.mrb[0].mxu0
      %v1901 = vadd.f32 %v1785, %v1900
      %v1902 = vpop.f32.mrb[0].mxu0
      %v1903 = vpop.f32.mrb[0].mxu0
      %v1904 = vadd.f32 %v1785, %v1903
      %v1905 = vpop.f32.mrb[0].mxu0
      %1906 = vmatprep.mubr.bf16.mxu0 0
      %1907 = vmatmul.mubr.bf16.gmra.mrb[0].mxu0 %v1826
      %v1908 = vpop.f32.mrb[0].mxu0
      %v1909 = vadd.f32 %v1785, %v1908
      %v1910 = vpop.f32.mrb[0].mxu0
      %v1911 = vpop.f32.mrb[0].mxu0
      %v1912 = vadd.f32 %v1785, %v1911
      %v1913 = vpop.f32.mrb[0].mxu0
      %1914 = vmatprep.mubr.bf16.mxu0 0
      %1915 = vmatmul.mubr.bf16.gmra.mrb[0].mxu0 %v1829
      %v1916 = vpop.f32.mrb[0].mxu0
      %v1917 = vadd.f32 %v1785, %v1916
      %v1918 = vpop.f32.mrb[0].mxu0
      %v1919 = vpop.f32.mrb[0].mxu0
      %v1920 = vadd.f32 %v1785, %v1919
      %v1921 = vpop.f32.mrb[0].mxu0
      %1922 = vmatprep.mubr.bf16.mxu0 0
      %1923 = vmatmul.mubr.bf16.gmra.mrb[0].mxu0 %v1832
      %v1924 = vpop.f32.mrb[0].mxu0
      %v1925 = vadd.f32 %v1785, %v1924
      %v1926 = vpop.f32.mrb[0].mxu0
      %v1927 = vpop.f32.mrb[0].mxu0
      %v1928 = vadd.f32 %v1785, %v1927
      %v1929 = vpop.f32.mrb[0].mxu0
      %1930 = vdwg.mxu0
      %vm1931 = vcmp.ge.f32.partialorder %v1869, 0.0
      %vm1932 = vcmp.ge.f32.partialorder %v1872, 0.0
      %vm1933 = vcmp.ge.f32.partialorder %v1877, 0.0
      %vm1934 = vcmp.ge.f32.partialorder %v1880, 0.0
      %vm1935 = vcmp.ge.f32.partialorder %v1885, 0.0
      %vm1936 = vcmp.ge.f32.partialorder %v1888, 0.0
      %vm1937 = vcmp.ge.f32.partialorder %v1893, 0.0
      %vm1938 = vcmp.ge.f32.partialorder %v1896, 0.0
      %vm1939 = vcmp.ge.f32.partialorder %v1901, 0.0
      %vm1940 = vcmp.ge.f32.partialorder %v1904, 0.0
      %vm1941 = vcmp.ge.f32.partialorder %v1909, 0.0
      %vm1942 = vcmp.ge.f32.partialorder %v1912, 0.0
      %vm1943 = vcmp.ge.f32.partialorder %v1917, 0.0
      %vm1944 = vcmp.ge.f32.partialorder %v1920, 0.0
      %vm1945 = vcmp.ge.f32.partialorder %v1925, 0.0
      %vm1946 = vcmp.ge.f32.partialorder %v1928, 0.0
      %v1947 = vmul.f32 %v1869, 0.01
      %v1948 = vmul.f32 %v1872, 0.01
      %v1949 = vmul.f32 %v1877, 0.01
      %v1950 = vmul.f32 %v1880, 0.01
      %v1951 = vmul.f32 %v1885, 0.01
      %v1952 = vmul.f32 %v1888, 0.01
      %v1953 = vmul.f32 %v1893, 0.01
      %v1954 = vmul.f32 %v1896, 0.01
      %v1955 = vmul.f32 %v1901, 0.01
      %v1956 = vmul.f32 %v1904, 0.01
      %v1957 = vmul.f32 %v1909, 0.01
      %v1958 = vmul.f32 %v1912, 0.01
      %v1959 = vmul.f32 %v1917, 0.01
      %v1960 = vmul.f32 %v1920, 0.01
      %v1961 = vmul.f32 %v1925, 0.01
      %v1962 = vmul.f32 %v1928, 0.01
      %v1963 = vsel %vm1931, %v1869, %v1947
      %v1964 = vsel %vm1932, %v1872, %v1948
      %v1965 = vsel %vm1933, %v1877, %v1949
      %v1966 = vsel %vm1934, %v1880, %v1950
      %v1967 = vsel %vm1935, %v1885, %v1951
      %v1968 = vsel %vm1936, %v1888, %v1952
      %v1969 = vsel %vm1937, %v1893, %v1953
      %v1970 = vsel %vm1938, %v1896, %v1954
      %v1971 = vsel %vm1939, %v1901, %v1955
      %v1972 = vsel %vm1940, %v1904, %v1956
      %v1973 = vsel %vm1941, %v1909, %v1957
      %v1974 = vsel %vm1942, %v1912, %v1958
      %v1975 = vsel %vm1943, %v1917, %v1959
      %v1976 = vsel %vm1944, %v1920, %v1960
      %v1977 = vsel %vm1945, %v1925, %v1961
      %v1978 = vsel %vm1946, %v1928, %v1962
      %v1979 = vld [vmem:[%s7 + $0x1] sm:$0x1]
      %v1980 = vld [vmem:[%s7 + $0x2] sm:$0x1]
      %v1981 = vsel %vm379, %v1963, 0.0
      %1982 = vadd.xlane.f32.xlu0 %v1981
      %v1983 = vpop.xlane.xlu0 %1982
      %v1984 = vsel %vm379, %v1964, 0.0
      %1985 = vadd.xlane.f32.xlu0 %v1984
      %v1986 = vpop.xlane.xlu0 %1985
      %v1987 = vsel %vm379, %v1965, 0.0
      %1988 = vadd.xlane.f32.xlu0 %v1987
      %v1989 = vpop.xlane.xlu0 %1988
      %v1990 = vsel %vm379, %v1966, 0.0
      %1991 = vadd.xlane.f32.xlu0 %v1990
      %v1992 = vpop.xlane.xlu0 %1991
      %v1993 = vsel %vm379, %v1967, 0.0
      %1994 = vadd.xlane.f32.xlu0 %v1993
      %v1995 = vpop.xlane.xlu0 %1994
      %v1996 = vsel %vm379, %v1968, 0.0
      %1997 = vadd.xlane.f32.xlu0 %v1996
      %v1998 = vpop.xlane.xlu0 %1997
      %v1999 = vsel %vm379, %v1969, 0.0
      %2000 = vadd.xlane.f32.xlu0 %v1999
      %v2001 = vpop.xlane.xlu0 %2000
      %v2002 = vsel %vm379, %v1970, 0.0
      %2003 = vadd.xlane.f32.xlu0 %v2002
      %v2004 = vpop.xlane.xlu0 %2003
      %v2005 = vsel %vm379, %v1971, 0.0
      %2006 = vadd.xlane.f32.xlu0 %v2005
      %v2007 = vpop.xlane.xlu0 %2006
      %v2008 = vsel %vm379, %v1972, 0.0
      %2009 = vadd.xlane.f32.xlu0 %v2008
      %v2010 = vpop.xlane.xlu0 %2009
      %v2011 = vsel %vm379, %v1973, 0.0
      %2012 = vadd.xlane.f32.xlu0 %v2011
      %v2013 = vpop.xlane.xlu0 %2012
      %v2014 = vsel %vm379, %v1974, 0.0
      %2015 = vadd.xlane.f32.xlu0 %v2014
      %v2016 = vpop.xlane.xlu0 %2015
      %v2017 = vsel %vm379, %v1975, 0.0
      %2018 = vadd.xlane.f32.xlu0 %v2017
      %v2019 = vpop.xlane.xlu0 %2018
      %v2020 = vsel %vm379, %v1976, 0.0
      %2021 = vadd.xlane.f32.xlu0 %v2020
      %v2022 = vpop.xlane.xlu0 %2021
      %v2023 = vsel %vm379, %v1977, 0.0
      %2024 = vadd.xlane.f32.xlu0 %v2023
      %v2025 = vpop.xlane.xlu0 %2024
      %v2026 = vsel %vm379, %v1978, 0.0
      %2027 = vadd.xlane.f32.xlu0 %v2026
      %v2028 = vpop.xlane.xlu0 %2027
      %v2029 = vmul.f32 %v1983, %v428
      %v2030 = vmul.f32 %v1986, %v428
      %v2031 = vmul.f32 %v1989, %v428
      %v2032 = vmul.f32 %v1992, %v428
      %v2033 = vmul.f32 %v1995, %v428
      %v2034 = vmul.f32 %v1998, %v428
      %v2035 = vmul.f32 %v2001, %v428
      %v2036 = vmul.f32 %v2004, %v428
      %v2037 = vmul.f32 %v2007, %v428
      %v2038 = vmul.f32 %v2010, %v428
      %v2039 = vmul.f32 %v2013, %v428
      %v2040 = vmul.f32 %v2016, %v428
      %v2041 = vmul.f32 %v2019, %v428
      %v2042 = vmul.f32 %v2022, %v428
      %v2043 = vmul.f32 %v2025, %v428
      %v2044 = vmul.f32 %v2028, %v428
      %v2045 = vsub.f32 %v1963, %v2029
      %v2046 = vsub.f32 %v1964, %v2030
      %v2047 = vsub.f32 %v1965, %v2031
      %v2048 = vsub.f32 %v1966, %v2032
      %v2049 = vsub.f32 %v1967, %v2033
      %v2050 = vsub.f32 %v1968, %v2034
      %v2051 = vsub.f32 %v1969, %v2035
      %v2052 = vsub.f32 %v1970, %v2036
      %v2053 = vsub.f32 %v1971, %v2037
      %v2054 = vsub.f32 %v1972, %v2038
      %v2055 = vsub.f32 %v1973, %v2039
      %v2056 = vsub.f32 %v1974, %v2040
      %v2057 = vsub.f32 %v1975, %v2041
      %v2058 = vsub.f32 %v1976, %v2042
      %v2059 = vsub.f32 %v1977, %v2043
      %v2060 = vsub.f32 %v1978, %v2044
      %v2061 = vmul.f32 %v2045, %v2045
      %v2062 = vmul.f32 %v2046, %v2046
      %v2063 = vmul.f32 %v2047, %v2047
      %v2064 = vmul.f32 %v2048, %v2048
      %v2065 = vmul.f32 %v2049, %v2049
      %v2066 = vmul.f32 %v2050, %v2050
      %v2067 = vmul.f32 %v2051, %v2051
      %v2068 = vmul.f32 %v2052, %v2052
      %v2069 = vmul.f32 %v2053, %v2053
      %v2070 = vmul.f32 %v2054, %v2054
      %v2071 = vmul.f32 %v2055, %v2055
      %v2072 = vmul.f32 %v2056, %v2056
      %v2073 = vmul.f32 %v2057, %v2057
      %v2074 = vmul.f32 %v2058, %v2058
      %v2075 = vmul.f32 %v2059, %v2059
      %v2076 = vmul.f32 %v2060, %v2060
      %v2077 = vsel %vm379, %v2061, 0.0
      %2078 = vadd.xlane.f32.xlu0 %v2077
      %v2079 = vpop.xlane.xlu0 %2078
      %v2080 = vsel %vm379, %v2062, 0.0
      %2081 = vadd.xlane.f32.xlu0 %v2080
      %v2082 = vpop.xlane.xlu0 %2081
      %v2083 = vsel %vm379, %v2063, 0.0
      %2084 = vadd.xlane.f32.xlu0 %v2083
      %v2085 = vpop.xlane.xlu0 %2084
      %v2086 = vsel %vm379, %v2064, 0.0
      %2087 = vadd.xlane.f32.xlu0 %v2086
      %v2088 = vpop.xlane.xlu0 %2087
      %v2089 = vsel %vm379, %v2065, 0.0
      %2090 = vadd.xlane.f32.xlu0 %v2089
      %v2091 = vpop.xlane.xlu0 %2090
      %v2092 = vsel %vm379, %v2066, 0.0
      %2093 = vadd.xlane.f32.xlu0 %v2092
      %v2094 = vpop.xlane.xlu0 %2093
      %v2095 = vsel %vm379, %v2067, 0.0
      %2096 = vadd.xlane.f32.xlu0 %v2095
      %v2097 = vpop.xlane.xlu0 %2096
      %v2098 = vsel %vm379, %v2068, 0.0
      %2099 = vadd.xlane.f32.xlu0 %v2098
      %v2100 = vpop.xlane.xlu0 %2099
      %v2101 = vsel %vm379, %v2069, 0.0
      %2102 = vadd.xlane.f32.xlu0 %v2101
      %v2103 = vpop.xlane.xlu0 %2102
      %v2104 = vsel %vm379, %v2070, 0.0
      %2105 = vadd.xlane.f32.xlu0 %v2104
      %v2106 = vpop.xlane.xlu0 %2105
      %v2107 = vsel %vm379, %v2071, 0.0
      %2108 = vadd.xlane.f32.xlu0 %v2107
      %v2109 = vpop.xlane.xlu0 %2108
      %v2110 = vsel %vm379, %v2072, 0.0
      %2111 = vadd.xlane.f32.xlu0 %v2110
      %v2112 = vpop.xlane.xlu0 %2111
      %v2113 = vsel %vm379, %v2073, 0.0
      %2114 = vadd.xlane.f32.xlu0 %v2113
      %v2115 = vpop.xlane.xlu0 %2114
      %v2116 = vsel %vm379, %v2074, 0.0
      %2117 = vadd.xlane.f32.xlu0 %v2116
      %v2118 = vpop.xlane.xlu0 %2117
      %v2119 = vsel %vm379, %v2075, 0.0
      %2120 = vadd.xlane.f32.xlu0 %v2119
      %v2121 = vpop.xlane.xlu0 %2120
      %v2122 = vsel %vm379, %v2076, 0.0
      %2123 = vadd.xlane.f32.xlu0 %v2122
      %v2124 = vpop.xlane.xlu0 %2123
      %v2125 = vmul.f32 %v2079, %v428
      %v2126 = vmul.f32 %v2082, %v428
      %v2127 = vmul.f32 %v2085, %v428
      %v2128 = vmul.f32 %v2088, %v428
      %v2129 = vmul.f32 %v2091, %v428
      %v2130 = vmul.f32 %v2094, %v428
      %v2131 = vmul.f32 %v2097, %v428
      %v2132 = vmul.f32 %v2100, %v428
      %v2133 = vmul.f32 %v2103, %v428
      %v2134 = vmul.f32 %v2106, %v428
      %v2135 = vmul.f32 %v2109, %v428
      %v2136 = vmul.f32 %v2112, %v428
      %v2137 = vmul.f32 %v2115, %v428
      %v2138 = vmul.f32 %v2118, %v428
      %v2139 = vmul.f32 %v2121, %v428
      %v2140 = vmul.f32 %v2124, %v428
      %v2141 = vadd.f32 %v2125, 1e-06
      %v2142 = vadd.f32 %v2126, 1e-06
      %v2143 = vadd.f32 %v2127, 1e-06
      %v2144 = vadd.f32 %v2128, 1e-06
      %v2145 = vadd.f32 %v2129, 1e-06
      %v2146 = vadd.f32 %v2130, 1e-06
      %v2147 = vadd.f32 %v2131, 1e-06
      %v2148 = vadd.f32 %v2132, 1e-06
      %v2149 = vadd.f32 %v2133, 1e-06
      %v2150 = vadd.f32 %v2134, 1e-06
      %v2151 = vadd.f32 %v2135, 1e-06
      %v2152 = vadd.f32 %v2136, 1e-06
      %v2153 = vadd.f32 %v2137, 1e-06
      %v2154 = vadd.f32 %v2138, 1e-06
      %v2155 = vadd.f32 %v2139, 1e-06
      %v2156 = vadd.f32 %v2140, 1e-06
      %v2157 = vrsqrt.pop %v2141
      %v2158 = vrsqrt.pop %v2142
      %v2159 = vrsqrt.pop %v2143
      %v2160 = vrsqrt.pop %v2144
      %v2161 = vrsqrt.pop %v2145
      %v2162 = vrsqrt.pop %v2146
      %v2163 = vrsqrt.pop %v2147
      %v2164 = vrsqrt.pop %v2148
      %v2165 = vrsqrt.pop %v2149
      %v2166 = vrsqrt.pop %v2150
      %v2167 = vrsqrt.pop %v2151
      %v2168 = vrsqrt.pop %v2152
      %v2169 = vrsqrt.pop %v2153
      %v2170 = vrsqrt.pop %v2154
      %v2171 = vrsqrt.pop %v2155
      %v2172 = vrsqrt.pop %v2156
      %v2173 = vmul.f32 %v2045, %v2157
      %v2174 = vmul.f32 %v2046, %v2158
      %v2175 = vmul.f32 %v2047, %v2159
      %v2176 = vmul.f32 %v2048, %v2160
      %v2177 = vmul.f32 %v2049, %v2161
      %v2178 = vmul.f32 %v2050, %v2162
      %v2179 = vmul.f32 %v2051, %v2163
      %v2180 = vmul.f32 %v2052, %v2164
      %v2181 = vmul.f32 %v2053, %v2165
      %v2182 = vmul.f32 %v2054, %v2166
      %v2183 = vmul.f32 %v2055, %v2167
      %v2184 = vmul.f32 %v2056, %v2168
      %v2185 = vmul.f32 %v2057, %v2169
      %v2186 = vmul.f32 %v2058, %v2170
      %v2187 = vmul.f32 %v2059, %v2171
      %v2188 = vmul.f32 %v2060, %v2172
      %v2189 = vlaneseq
      %v2190 = vshrl.u32 %v2189, 7
      %v2191 = vsub.s32 0, %v2190
      %v2192 = vrot.slane %v1979, %v2191
      %v2193 = vmul.f32 %v2173, %v2192
      %v2194 = vmul.f32 %v2174, %v2192
      %v2195 = vmul.f32 %v2175, %v2192
      %v2196 = vmul.f32 %v2176, %v2192
      %v2197 = vmul.f32 %v2177, %v2192
      %v2198 = vmul.f32 %v2178, %v2192
      %v2199 = vmul.f32 %v2179, %v2192
      %v2200 = vmul.f32 %v2180, %v2192
      %v2201 = vmul.f32 %v2181, %v2192
      %v2202 = vmul.f32 %v2182, %v2192
      %v2203 = vmul.f32 %v2183, %v2192
      %v2204 = vmul.f32 %v2184, %v2192
      %v2205 = vmul.f32 %v2185, %v2192
      %v2206 = vmul.f32 %v2186, %v2192
      %v2207 = vmul.f32 %v2187, %v2192
      %v2208 = vmul.f32 %v2188, %v2192
      %v2209 = vlaneseq
      %v2210 = vshrl.u32 %v2209, 7
      %v2211 = vsub.s32 0, %v2210
      %v2212 = vrot.slane %v1980, %v2211
      %v2213 = vadd.f32 %v2193, %v2212
      %v2214 = vadd.f32 %v2194, %v2212
      %v2215 = vadd.f32 %v2195, %v2212
      %v2216 = vadd.f32 %v2196, %v2212
      %v2217 = vadd.f32 %v2197, %v2212
      %v2218 = vadd.f32 %v2198, %v2212
      %v2219 = vadd.f32 %v2199, %v2212
      %v2220 = vadd.f32 %v2200, %v2212
      %v2221 = vadd.f32 %v2201, %v2212
      %v2222 = vadd.f32 %v2202, %v2212
      %v2223 = vadd.f32 %v2203, %v2212
      %v2224 = vadd.f32 %v2204, %v2212
      %v2225 = vadd.f32 %v2205, %v2212
      %v2226 = vadd.f32 %v2206, %v2212
      %v2227 = vadd.f32 %v2207, %v2212
      %v2228 = vadd.f32 %v2208, %v2212
      %v2229 = vld [vmem:[%s7 + $0x3] sm:$0x1]
      %v2230 = vlaneseq
      %v2231 = vshrl.u32 %v2230, 7
      %v2232 = vsub.s32 0, %v2231
      %v2233 = vrot.slane %v2229, %v2232
      %v2234 = vmul.f32 %v2213, %v2233
      %v2235 = vmul.f32 %v2214, %v2233
      %v2236 = vmul.f32 %v2215, %v2233
      %v2237 = vmul.f32 %v2216, %v2233
      %v2238 = vmul.f32 %v2217, %v2233
      %v2239 = vmul.f32 %v2218, %v2233
      %v2240 = vmul.f32 %v2219, %v2233
      %v2241 = vmul.f32 %v2220, %v2233
      %v2242 = vmul.f32 %v2221, %v2233
      %v2243 = vmul.f32 %v2222, %v2233
      %v2244 = vmul.f32 %v2223, %v2233
      %v2245 = vmul.f32 %v2224, %v2233
      %v2246 = vmul.f32 %v2225, %v2233
      %v2247 = vmul.f32 %v2226, %v2233
      %v2248 = vmul.f32 %v2227, %v2233
      %v2249 = vmul.f32 %v2228, %v2233
      %v2250 = vsel %vm379, %v2234, 0.0
      %2251 = vadd.xlane.f32.xlu0 %v2250
      %v2252 = vpop.xlane.xlu0 %2251
      %v2253 = vsel %vm379, %v2235, 0.0
      %2254 = vadd.xlane.f32.xlu0 %v2253
      %v2255 = vpop.xlane.xlu0 %2254
      %v2256 = vsel %vm379, %v2236, 0.0
      %2257 = vadd.xlane.f32.xlu0 %v2256
      %v2258 = vpop.xlane.xlu0 %2257
      %v2259 = vsel %vm379, %v2237, 0.0
      %2260 = vadd.xlane.f32.xlu0 %v2259
      %v2261 = vpop.xlane.xlu0 %2260
      %v2262 = vsel %vm379, %v2238, 0.0
      %2263 = vadd.xlane.f32.xlu0 %v2262
      %v2264 = vpop.xlane.xlu0 %2263
      %v2265 = vsel %vm379, %v2239, 0.0
      %2266 = vadd.xlane.f32.xlu0 %v2265
      %v2267 = vpop.xlane.xlu0 %2266
      %v2268 = vsel %vm379, %v2240, 0.0
      %2269 = vadd.xlane.f32.xlu0 %v2268
      %v2270 = vpop.xlane.xlu0 %2269
      %v2271 = vsel %vm379, %v2241, 0.0
      %2272 = vadd.xlane.f32.xlu0 %v2271
      %v2273 = vpop.xlane.xlu0 %2272
      %v2274 = vsel %vm379, %v2242, 0.0
      %2275 = vadd.xlane.f32.xlu0 %v2274
      %v2276 = vpop.xlane.xlu0 %2275
      %v2277 = vsel %vm379, %v2243, 0.0
      %2278 = vadd.xlane.f32.xlu0 %v2277
      %v2279 = vpop.xlane.xlu0 %2278
      %v2280 = vsel %vm379, %v2244, 0.0
      %2281 = vadd.xlane.f32.xlu0 %v2280
      %v2282 = vpop.xlane.xlu0 %2281
      %v2283 = vsel %vm379, %v2245, 0.0
      %2284 = vadd.xlane.f32.xlu0 %v2283
      %v2285 = vpop.xlane.xlu0 %2284
      %v2286 = vsel %vm379, %v2246, 0.0
      %2287 = vadd.xlane.f32.xlu0 %v2286
      %v2288 = vpop.xlane.xlu0 %2287
      %v2289 = vsel %vm379, %v2247, 0.0
      %2290 = vadd.xlane.f32.xlu0 %v2289
      %v2291 = vpop.xlane.xlu0 %2290
      %v2292 = vsel %vm379, %v2248, 0.0
      %2293 = vadd.xlane.f32.xlu0 %v2292
      %v2294 = vpop.xlane.xlu0 %2293
      %v2295 = vsel %vm379, %v2249, 0.0
      %2296 = vadd.xlane.f32.xlu0 %v2295
      %v2297 = vpop.xlane.xlu0 %2296
      %v2298 = vld [vmem:[#allocation2] sm:$0x1]
      %v2300 = vlaneseq
      %v2301 = vshrl.u32 %v2300, 7
      %v2302 = vsub.s32 0, %v2301
      %v2303 = vrot.slane %v2298, %v2302
      %v2305 = vadd.f32 %v2252, %v2303
      %v2306 = vadd.f32 %v2255, %v2303
      %v2307 = vadd.f32 %v2258, %v2303
      %v2308 = vadd.f32 %v2261, %v2303
      %v2309 = vadd.f32 %v2264, %v2303
      %v2310 = vadd.f32 %v2267, %v2303
      %v2311 = vadd.f32 %v2270, %v2303
      %v2312 = vadd.f32 %v2273, %v2303
      %v2313 = vadd.f32 %v2276, %v2303
      %v2314 = vadd.f32 %v2279, %v2303
      %v2315 = vadd.f32 %v2282, %v2303
      %v2316 = vadd.f32 %v2285, %v2303
      %v2317 = vadd.f32 %v2288, %v2303
      %v2318 = vadd.f32 %v2291, %v2303
      %v2319 = vadd.f32 %v2294, %v2303
      %v2320 = vadd.f32 %v2297, %v2303
      %vm2321 = vcmask 7168
      %2322 = vst.msk [vmem:[%s358] sm:$0xff] %vm2321, %v2305
      %2323 = vst.msk [vmem:[%s358 + $0x8] sm:$0xff] %vm2321, %v2306
      %2324 = vst.msk [vmem:[%s358 + $0x10] sm:$0xff] %vm2321, %v2307
      %2325 = vst.msk [vmem:[%s358 + $0x18] sm:$0xff] %vm2321, %v2308
      %2326 = vst.msk [vmem:[%s358 + $0x20] sm:$0xff] %vm2321, %v2309
      %2327 = vst.msk [vmem:[%s358 + $0x28] sm:$0xff] %vm2321, %v2310
      %2328 = vst.msk [vmem:[%s358 + $0x30] sm:$0xff] %vm2321, %v2311
      %2329 = vst.msk [vmem:[%s358 + $0x38] sm:$0xff] %vm2321, %v2312
      %2330 = vst.msk [vmem:[%s358 + $0x40] sm:$0xff] %vm2321, %v2313
      %2331 = vst.msk [vmem:[%s358 + $0x48] sm:$0xff] %vm2321, %v2314
      %2332 = vst.msk [vmem:[%s358 + $0x50] sm:$0xff] %vm2321, %v2315
      %2333 = vst.msk [vmem:[%s358 + $0x58] sm:$0xff] %vm2321, %v2316
      %2334 = vst.msk [vmem:[%s358 + $0x60] sm:$0xff] %vm2321, %v2317
      %2335 = vst.msk [vmem:[%s358 + $0x68] sm:$0xff] %vm2321, %v2318
      %2336 = vst.msk [vmem:[%s358 + $0x70] sm:$0xff] %vm2321, %v2319
      %2337 = vst.msk [vmem:[%s358 + $0x78] sm:$0xff] %vm2321, %v2320
      %s2338 = smul.u32 16, %s22
      %p2339 = scmp.lt.s32.totalorder %s2338, 31
      %s2340 = scalar_select %p2339, %s2338, 31
      %s2341 = smul.addr %s2340, 8
      %s2342 = scalar_lea.vmem %s9, %s2341
      // Predicated region
      $region57: #{tpu_custom_call.1} parent=55 // pred_check
        %p2343 = pneg %p239
      $region58: #{tpu_custom_call.1} parent=55 // pred_check_branch
        %2345 = sbr.rel (%p2343) target = $region60
      $region59: #{tpu_custom_call.1} parent=55 // pred_region
        %s2346 = smul.u32 16, %s22
      $region60: #{tpu_custom_call.1} parent=55 // pred_fallthru
        _
    $region56: #{tpu_custom_call.1} parent=5 // pred_fallthru
      _
    %p2347 = scmp.le.s32.totalorder 2, %s17
    // Predicated region
    $region61: #{tpu_custom_call.1} parent=5 // pred_check
      %p2348 = pneg %p2347
    $region62: #{tpu_custom_call.1} parent=5 // pred_check_branch
      %2350 = sbr.rel (%p2348) target = $region64
    $region63: #{tpu_custom_call.1} parent=5 // pred_region
      %s2351 = ssub.s32 %s17, 2
      // Predicated region
      $region65: #{tpu_custom_call.1} parent=63 // pred_check
        %p2352 = pneg %p245
      $region66: #{tpu_custom_call.1} parent=63 // pred_check_branch
        %2354 = sbr.rel (%p2352) target = $region68
      $region67: #{tpu_custom_call.1} parent=63 // pred_region
        %s2355 = smul.u32 16, %s23
        %p2356 = scmp.lt.s32.totalorder %s2355, 31
        %s2357 = scalar_select %p2356, %s2355, 31
        %s2358 = smul.addr %s2357, 8
        %s2359 = scalar_lea.vmem %s9, %s2358
      $region68: #{tpu_custom_call.1} parent=63 // pred_fallthru
        _
    $region64: #{tpu_custom_call.1} parent=5 // pred_fallthru
      _
  $region6: #{tpu_custom_call.1} parent=0 // loop_footer
    %s21 = sadd.s32 1, %s17
  $region7: #{tpu_custom_call.1} parent=0 // loop_footer_branch
    %16 = sbr.rel target = $region3
  $region8: #{tpu_custom_call.1} parent=0 // loop_exit
    _

</llo_original>
